<compile_context>
chip_gen: v6e
topology: v6e:2x2x1
jax: 0.10.0
libtpu: 0.0.40
codegen_flags: <defaults>
</compile_context>

<pallas_src>
import jax
import jax.numpy as jnp
from jax.experimental import pallas as pl
from jax.experimental.pallas import tpu as pltpu


# ----------------------------------------------------------------------------
# Fused kernel: all layers + pooling + heads
# ----------------------------------------------------------------------------
def crystal_encoder_kernel(x0_ref, gs_ref, gd_ref, gdt_ref, ea_ref, pmat_ref,
                           wfi_ref, wfj_ref, wfe_ref, bf_ref,
                           wsi_ref, wsj_ref, wse_ref, bs_ref,
                           sc_ref, sh_ref,
                           wr_ref, br_ref, wnh_ref, bnh_ref,
                           out_ref, logit_ref,
                           x_vmem):
    l = pl.program_id(0)

    # Load the initial node features into the resident VMEM accumulator once.
    @pl.when(l == 0)
    def _():
        x_vmem[...] = x0_ref[...]

    x = x_vmem[...]                                                      # (N, F) f32

    # ---- CGConv message passing (gathers as exact f32 one-hot matmuls) ------
    xi = jnp.dot(gd_ref[...], x, preferred_element_type=jnp.float32)    # (E, F) = x[dst]
    xj = jnp.dot(gs_ref[...], x, preferred_element_type=jnp.float32)    # (E, F) = x[src]

    xi_b = xi.astype(jnp.bfloat16)
    xj_b = xj.astype(jnp.bfloat16)
    ea_b = ea_ref[...].astype(jnp.bfloat16)

    # z @ W  with z = [x_i, x_j, e]  rewritten as a sum of three matmuls.
    f_pre = (jnp.dot(xi_b, wfi_ref[0], preferred_element_type=jnp.float32)
             + jnp.dot(xj_b, wfj_ref[0], preferred_element_type=jnp.float32)
             + jnp.dot(ea_b, wfe_ref[0], preferred_element_type=jnp.float32)
             + bf_ref[0])
    s_pre = (jnp.dot(xi_b, wsi_ref[0], preferred_element_type=jnp.float32)
             + jnp.dot(xj_b, wsj_ref[0], preferred_element_type=jnp.float32)
             + jnp.dot(ea_b, wse_ref[0], preferred_element_type=jnp.float32)
             + bs_ref[0])

    gate = 1.0 / (1.0 + jnp.exp(-f_pre))                                 # sigmoid
    core = jnp.maximum(s_pre, 0.0) + jnp.log(1.0 + jnp.exp(-jnp.abs(s_pre)))  # softplus
    msg = gate * core                                                    # (E, F)

    # scatter-add into destination nodes, then the CGConv residual
    agg = jnp.dot(gdt_ref[...], msg, preferred_element_type=jnp.float32)  # (N, F)
    xc = x + agg

    # ---- BatchNorm (eval mode, folded to scale/shift) + ReLU ----------------
    xb = xc * sc_ref[0] + sh_ref[0]
    x_new = jnp.maximum(xb, 0.0)
    x_vmem[...] = x_new

    # ---- heads, fused into the final grid step ------------------------------
    @pl.when(l == pl.num_programs(0) - 1)
    def _():
        # node head: Linear(F, 1) as a broadcast-multiply + lane reduction
        logit_ref[...] = (jnp.sum(x_new * wnh_ref[...], axis=-1, keepdims=True)
                          + bnh_ref[...])                                # (N, 1)
        # global mean pool (one-hot/|graph| matmul) + readout Linear
        pooled = jnp.dot(pmat_ref[...], x_new,
                         preferred_element_type=jnp.float32)             # (B, F)
        out_ref[...] = (jnp.dot(pooled.astype(jnp.bfloat16), wr_ref[...],
                                preferred_element_type=jnp.float32)
                        + br_ref[...])                                   # (B, O)


# ----------------------------------------------------------------------------
# pallas_call wrapper
# ----------------------------------------------------------------------------
def _shared(shape):
    # whole-array block, same tile for every layer step (stays VMEM resident)
    return pl.BlockSpec(shape, lambda l, _nd=len(shape): (0,) * _nd)


def _per_layer(tail):
    # array shape (L, *tail); stream one layer's slice per grid step
    return pl.BlockSpec((1,) + tail, lambda l, _nd=len(tail): (l,) + (0,) * _nd)


def _crystal_pallas(x0, gs, gd, gdt, edge_attr, pmat, params):
    N, F = x0.shape
    E, De = edge_attr.shape
    B = pmat.shape[0]
    L = params["wfi"].shape[0]
    O = params["wr"].shape[1]

    in_specs = [
        _shared((N, F)), _shared((E, N)), _shared((E, N)), _shared((N, E)),
        _shared((E, De)), _shared((B, N)),
        _per_layer((F, F)), _per_layer((F, F)), _per_layer((De, F)), _per_layer((1, F)),
        _per_layer((F, F)), _per_layer((F, F)), _per_layer((De, F)), _per_layer((1, F)),
        _per_layer((1, F)), _per_layer((1, F)),
        _shared((F, O)), _shared((1, O)), _shared((1, F)), _shared((1, 1)),
    ]
    out_specs = (pl.BlockSpec((B, O), lambda l: (0, 0)),
                 pl.BlockSpec((N, 1), lambda l: (0, 0)))
    out_shape = (jax.ShapeDtypeStruct((B, O), jnp.float32),
                 jax.ShapeDtypeStruct((N, 1), jnp.float32))

    readout, logits = pl.pallas_call(
        crystal_encoder_kernel,
        out_shape=out_shape,
        grid=(L,),
        in_specs=in_specs,
        out_specs=out_specs,
        scratch_shapes=[pltpu.VMEM((N, F), jnp.float32)],
        # layer axis is a sequential carry -> "arbitrary" (single-step grid;
        # on v7x a parallel split would need an independent axis, not the carry).
        compiler_params=pltpu.CompilerParams(dimension_semantics=("arbitrary",)),
    )(x0, gs, gd, gdt, edge_attr, pmat,
      params["wfi"], params["wfj"], params["wfe"], params["bf"],
      params["wsi"], params["wsj"], params["wse"], params["bs"],
      params["bn_scale"], params["bn_shift"],
      params["wr"], params["br"], params["wnh"], params["bnh"])
    return readout, logits[:, 0]


def crystal_encoder_forward(x, edge_index, edge_attr, batch, params, num_graphs):
    """x: (N,F) f32, edge_index: (2,E) i32 [src; dst], edge_attr: (E,De), batch: (N,)."""
    N = x.shape[0]
    src, dst = edge_index[0], edge_index[1]
    # graph connectivity as dense one-hot operators (glue; built once in plain JAX)
    gs = jax.nn.one_hot(src, N, dtype=jnp.float32)          # (E, N) gather of x[src]
    gd = jax.nn.one_hot(dst, N, dtype=jnp.float32)          # (E, N) gather of x[dst]
    gdt = gd.T                                              # (N, E) scatter-add to dst
    onehot_b = jax.nn.one_hot(batch, num_graphs, dtype=jnp.float32)   # (N, B)
    counts = jnp.sum(onehot_b, axis=0)                                # (B,)
    pmat = onehot_b.T / jnp.maximum(counts, 1.0)[:, None]             # (B, N) mean-pool
    return _crystal_pallas(x, gs, gd, gdt, edge_attr, pmat, params)


# ----------------------------------------------------------------------------
# Parameters (deterministic init, eval-mode BatchNorm folded to scale/shift)
# ----------------------------------------------------------------------------
def init_params(key, node_feat, edge_feat, num_layers, out_dim):
    F, De, L, O = node_feat, edge_feat, num_layers, out_dim
    ks = jax.random.split(key, 8)

    def normal(k, shape, scale=0.1):
        return scale * jax.random.normal(k, shape, dtype=jnp.float32)

    # CGConv lin_f / lin_s: Linear(2F+De, F); stored pre-transposed (in, out),
    # pre-split into the x_i / x_j / edge_attr blocks, streamed in bf16.
    wf = normal(ks[0], (L, 2 * F + De, F))
    ws = normal(ks[1], (L, 2 * F + De, F))
    bf = normal(ks[2], (L, 1, F), scale=0.02)
    bs = normal(ks[3], (L, 1, F), scale=0.02)

    # BatchNorm (eval): fold gamma/beta/running stats into scale & shift
    gamma = jnp.ones((L, 1, F), jnp.float32)
    beta = jnp.zeros((L, 1, F), jnp.float32)
    run_mean = normal(ks[4], (L, 1, F), scale=0.05)
    run_var = 0.5 + jax.random.uniform(ks[5], (L, 1, F), dtype=jnp.float32)
    bn_scale = gamma / jnp.sqrt(run_var + 1e-5)
    bn_shift = beta - run_mean * bn_scale
    # TODO(synk): training-mode BatchNorm (batch statistics) path not implemented;
    # this is the eval-mode (running-stats) forward.

    return {
        "wfi": wf[:, 0:F, :].astype(jnp.bfloat16),
        "wfj": wf[:, F:2 * F, :].astype(jnp.bfloat16),
        "wfe": wf[:, 2 * F:, :].astype(jnp.bfloat16),
        "bf": bf,
        "wsi": ws[:, 0:F, :].astype(jnp.bfloat16),
        "wsj": ws[:, F:2 * F, :].astype(jnp.bfloat16),
        "wse": ws[:, 2 * F:, :].astype(jnp.bfloat16),
        "bs": bs,
        "bn_scale": bn_scale,
        "bn_shift": bn_shift,
        "wr": normal(ks[6], (F, O)).astype(jnp.bfloat16),     # readout (pre-transposed)
        "br": jnp.zeros((1, O), jnp.float32),
        "wnh": normal(ks[7], (1, F)),                         # node head weight (row)
        "bnh": jnp.zeros((1, 1), jnp.float32),
    }


# ----------------------------------------------------------------------------
if __name__ == "__main__":
    node_feat = 64
    edge_feat = 64
    num_layers = 6
    out_dim = 256
    N, E, B = 16, 48, 2          # small graph: 16 nodes, 48 edges, 2 graphs

    key = jax.random.PRNGKey(0)
    k_p, k_x, k_e, k_ei = jax.random.split(key, 4)
    params = init_params(k_p, node_feat, edge_feat, num_layers, out_dim)

    x = jax.random.normal(k_x, (N, node_feat), dtype=jnp.float32)
    edge_attr = jax.random.normal(k_e, (E, edge_feat), dtype=jnp.float32)
    edge_index = jax.random.randint(k_ei, (2, E), 0, N, dtype=jnp.int32)
    batch = jnp.concatenate([jnp.zeros((N // 2,), jnp.int32),
                             jnp.ones((N - N // 2,), jnp.int32)])

    readout, node_logits = crystal_encoder_forward(
        x, edge_index, edge_attr, batch, params, num_graphs=B)
    readout = jax.block_until_ready(readout)
    node_logits = jax.block_until_ready(node_logits)

    assert readout.shape == (B, out_dim) and readout.dtype == jnp.float32
    assert node_logits.shape == (N,) and node_logits.dtype == jnp.float32
    print("KERNEL_OK")
</pallas_src>

<mosaic_0001>
module attributes {stable_mosaic.version = 11 : i64} {
  func.func @crystal_encoder_kernel(%arg0: i32, %arg1: memref<16x64xf32, #tpu.memory_space<vmem>>, %arg2: memref<48x16xf32, #tpu.memory_space<vmem>>, %arg3: memref<48x16xf32, #tpu.memory_space<vmem>>, %arg4: memref<16x48xf32, #tpu.memory_space<vmem>>, %arg5: memref<48x64xf32, #tpu.memory_space<vmem>>, %arg6: memref<2x16xf32, #tpu.memory_space<vmem>>, %arg7: memref<1x64x64xbf16, #tpu.memory_space<vmem>>, %arg8: memref<1x64x64xbf16, #tpu.memory_space<vmem>>, %arg9: memref<1x64x64xbf16, #tpu.memory_space<vmem>>, %arg10: memref<1x1x64xf32, #tpu.memory_space<vmem>>, %arg11: memref<1x64x64xbf16, #tpu.memory_space<vmem>>, %arg12: memref<1x64x64xbf16, #tpu.memory_space<vmem>>, %arg13: memref<1x64x64xbf16, #tpu.memory_space<vmem>>, %arg14: memref<1x1x64xf32, #tpu.memory_space<vmem>>, %arg15: memref<1x1x64xf32, #tpu.memory_space<vmem>>, %arg16: memref<1x1x64xf32, #tpu.memory_space<vmem>>, %arg17: memref<64x256xbf16, #tpu.memory_space<vmem>>, %arg18: memref<1x256xf32, #tpu.memory_space<vmem>>, %arg19: memref<1x64xf32, #tpu.memory_space<vmem>>, %arg20: memref<1x1xf32, #tpu.memory_space<vmem>>, %arg21: memref<2x256xf32, #tpu.memory_space<vmem>>, %arg22: memref<16x1xf32, #tpu.memory_space<vmem>>, %arg23: memref<16x64xf32, #tpu.memory_space<vmem>>) attributes {dimension_semantics = [#tpu.dimension_semantics<arbitrary>], iteration_bounds = array<i64: 6>, scalar_prefetch = 0 : i64, scratch_operands = 1 : i64, tpu.core_type = #tpu.core_type<tc>, window_params = [{pipeline_mode = #tpu.pipeline_mode<synchronous>, transform_indices = @transform_0, window_bounds = array<i64: 16, 64>}, {pipeline_mode = #tpu.pipeline_mode<synchronous>, transform_indices = @transform_1, window_bounds = array<i64: 48, 16>}, {pipeline_mode = #tpu.pipeline_mode<synchronous>, transform_indices = @transform_2, window_bounds = array<i64: 48, 16>}, {pipeline_mode = #tpu.pipeline_mode<synchronous>, transform_indices = @transform_3, window_bounds = array<i64: 16, 48>}, {pipeline_mode = #tpu.pipeline_mode<synchronous>, transform_indices = @transform_4, window_bounds = array<i64: 48, 64>}, {pipeline_mode = #tpu.pipeline_mode<synchronous>, transform_indices = @transform_5, window_bounds = array<i64: 2, 16>}, {transform_indices = @transform_6, window_bounds = array<i64: 1, 64, 64>}, {transform_indices = @transform_7, window_bounds = array<i64: 1, 64, 64>}, {transform_indices = @transform_8, window_bounds = array<i64: 1, 64, 64>}, {transform_indices = @transform_9, window_bounds = array<i64: 1, 1, 64>}, {transform_indices = @transform_10, window_bounds = array<i64: 1, 64, 64>}, {transform_indices = @transform_11, window_bounds = array<i64: 1, 64, 64>}, {transform_indices = @transform_12, window_bounds = array<i64: 1, 64, 64>}, {transform_indices = @transform_13, window_bounds = array<i64: 1, 1, 64>}, {transform_indices = @transform_14, window_bounds = array<i64: 1, 1, 64>}, {transform_indices = @transform_15, window_bounds = array<i64: 1, 1, 64>}, {pipeline_mode = #tpu.pipeline_mode<synchronous>, transform_indices = @transform_16, window_bounds = array<i64: 64, 256>}, {pipeline_mode = #tpu.pipeline_mode<synchronous>, transform_indices = @transform_17, window_bounds = array<i64: 1, 256>}, {pipeline_mode = #tpu.pipeline_mode<synchronous>, transform_indices = @transform_18, window_bounds = array<i64: 1, 64>}, {pipeline_mode = #tpu.pipeline_mode<synchronous>, transform_indices = @transform_19, window_bounds = array<i64: 1, 1>}, {pipeline_mode = #tpu.pipeline_mode<synchronous>, transform_indices = @transform_20, window_bounds = array<i64: 2, 256>}, {pipeline_mode = #tpu.pipeline_mode<synchronous>, transform_indices = @transform_21, window_bounds = array<i64: 16, 1>}]} {
    %c0_i32 = arith.constant 0 : i32
    %0 = arith.cmpi eq, %arg0, %c0_i32 : i32
    %1 = arith.extui %0 : i1 to i32
    %c0_i32_0 = arith.constant 0 : i32
    %2 = arith.cmpi ne, %1, %c0_i32_0 : i32
    scf.if %2 {
      %c0_58 = arith.constant 0 : index
      %c0_59 = arith.constant 0 : index
      %77 = vector.load %arg1[%c0_58, %c0_59] : memref<16x64xf32, #tpu.memory_space<vmem>>, vector<16x64xf32>
      %c0_60 = arith.constant 0 : index
      %c0_61 = arith.constant 0 : index
      %78 = vector.load %arg23[%c0_60, %c0_61] : memref<16x64xf32, #tpu.memory_space<vmem>>, vector<16x64xf32>
      tpu.vector_store %arg23[%c0_60, %c0_61], %77 {strides = array<i32>} : memref<16x64xf32, #tpu.memory_space<vmem>>, vector<16x64xf32>,
    } else {
    }
    %c0 = arith.constant 0 : index
    %c0_1 = arith.constant 0 : index
    %3 = vector.load %arg23[%c0, %c0_1] : memref<16x64xf32, #tpu.memory_space<vmem>>, vector<16x64xf32>
    %c0_2 = arith.constant 0 : index
    %c0_3 = arith.constant 0 : index
    %4 = vector.load %arg3[%c0_2, %c0_3] : memref<48x16xf32, #tpu.memory_space<vmem>>, vector<48x16xf32>
    %cst = arith.constant dense<0.000000e+00> : vector<48x64xf32>
    %5 = tpu.matmul %4, %3, %cst {dimension_numbers = #tpu.dot_dimension_numbers<[1], [0], [0], [1], [0, 0, 1, 1], [], []>} : vector<48x16xf32>, vector<16x64xf32>, vector<48x64xf32> -> vector<48x64xf32>
    %c0_4 = arith.constant 0 : index
    %c0_5 = arith.constant 0 : index
    %6 = vector.load %arg2[%c0_4, %c0_5] : memref<48x16xf32, #tpu.memory_space<vmem>>, vector<48x16xf32>
    %cst_6 = arith.constant dense<0.000000e+00> : vector<48x64xf32>
    %7 = tpu.matmul %6, %3, %cst_6 {dimension_numbers = #tpu.dot_dimension_numbers<[1], [0], [0], [1], [0, 0, 1, 1], [], []>} : vector<48x16xf32>, vector<16x64xf32>, vector<48x64xf32> -> vector<48x64xf32>
    %8 = arith.truncf %5 : vector<48x64xf32> to vector<48x64xbf16>
    %9 = arith.truncf %7 : vector<48x64xf32> to vector<48x64xbf16>
    %c0_7 = arith.constant 0 : index
    %c0_8 = arith.constant 0 : index
    %10 = vector.load %arg5[%c0_7, %c0_8] : memref<48x64xf32, #tpu.memory_space<vmem>>, vector<48x64xf32>
    %11 = arith.truncf %10 : vector<48x64xf32> to vector<48x64xbf16>
    %c0_9 = arith.constant 0 : index
    %c0_10 = arith.constant 0 : index
    %c0_11 = arith.constant 0 : index
    %12 = vector.load %arg7[%c0_9, %c0_10, %c0_11] : memref<1x64x64xbf16, #tpu.memory_space<vmem>>, vector<1x64x64xbf16>
    %13 = vector.shape_cast %12 : vector<1x64x64xbf16> to vector<64x64xbf16>
    %cst_12 = arith.constant dense<0.000000e+00> : vector<48x64xf32>
    %14 = tpu.matmul %8, %13, %cst_12 {dimension_numbers = #tpu.dot_dimension_numbers<[1], [0], [0], [1], [0, 0, 1, 1], [], []>} : vector<48x64xbf16>, vector<64x64xbf16>, vector<48x64xf32> -> vector<48x64xf32>
    %c0_13 = arith.constant 0 : index
    %c0_14 = arith.constant 0 : index
    %c0_15 = arith.constant 0 : index
    %15 = vector.load %arg8[%c0_13, %c0_14, %c0_15] : memref<1x64x64xbf16, #tpu.memory_space<vmem>>, vector<1x64x64xbf16>
    %16 = vector.shape_cast %15 : vector<1x64x64xbf16> to vector<64x64xbf16>
    %cst_16 = arith.constant dense<0.000000e+00> : vector<48x64xf32>
    %17 = tpu.matmul %9, %16, %cst_16 {dimension_numbers = #tpu.dot_dimension_numbers<[1], [0], [0], [1], [0, 0, 1, 1], [], []>} : vector<48x64xbf16>, vector<64x64xbf16>, vector<48x64xf32> -> vector<48x64xf32>
    %18 = arith.addf %14, %17 : vector<48x64xf32>
    %c0_17 = arith.constant 0 : index
    %c0_18 = arith.constant 0 : index
    %c0_19 = arith.constant 0 : index
    %19 = vector.load %arg9[%c0_17, %c0_18, %c0_19] : memref<1x64x64xbf16, #tpu.memory_space<vmem>>, vector<1x64x64xbf16>
    %20 = vector.shape_cast %19 : vector<1x64x64xbf16> to vector<64x64xbf16>
    %cst_20 = arith.constant dense<0.000000e+00> : vector<48x64xf32>
    %21 = tpu.matmul %11, %20, %cst_20 {dimension_numbers = #tpu.dot_dimension_numbers<[1], [0], [0], [1], [0, 0, 1, 1], [], []>} : vector<48x64xbf16>, vector<64x64xbf16>, vector<48x64xf32> -> vector<48x64xf32>
    %22 = arith.addf %18, %21 : vector<48x64xf32>
    %c0_21 = arith.constant 0 : index
    %c0_22 = arith.constant 0 : index
    %c0_23 = arith.constant 0 : index
    %23 = vector.load %arg10[%c0_21, %c0_22, %c0_23] : memref<1x1x64xf32, #tpu.memory_space<vmem>>, vector<1x1x64xf32>
    %24 = vector.shape_cast %23 : vector<1x1x64xf32> to vector<1x64xf32>
    %25 = vector.broadcast %24 : vector<1x64xf32> to vector<48x64xf32>
    %26 = arith.addf %22, %25 : vector<48x64xf32>
    %c0_24 = arith.constant 0 : index
    %c0_25 = arith.constant 0 : index
    %c0_26 = arith.constant 0 : index
    %27 = vector.load %arg11[%c0_24, %c0_25, %c0_26] : memref<1x64x64xbf16, #tpu.memory_space<vmem>>, vector<1x64x64xbf16>
    %28 = vector.shape_cast %27 : vector<1x64x64xbf16> to vector<64x64xbf16>
    %cst_27 = arith.constant dense<0.000000e+00> : vector<48x64xf32>
    %29 = tpu.matmul %8, %28, %cst_27 {dimension_numbers = #tpu.dot_dimension_numbers<[1], [0], [0], [1], [0, 0, 1, 1], [], []>} : vector<48x64xbf16>, vector<64x64xbf16>, vector<48x64xf32> -> vector<48x64xf32>
    %c0_28 = arith.constant 0 : index
    %c0_29 = arith.constant 0 : index
    %c0_30 = arith.constant 0 : index
    %30 = vector.load %arg12[%c0_28, %c0_29, %c0_30] : memref<1x64x64xbf16, #tpu.memory_space<vmem>>, vector<1x64x64xbf16>
    %31 = vector.shape_cast %30 : vector<1x64x64xbf16> to vector<64x64xbf16>
    %cst_31 = arith.constant dense<0.000000e+00> : vector<48x64xf32>
    %32 = tpu.matmul %9, %31, %cst_31 {dimension_numbers = #tpu.dot_dimension_numbers<[1], [0], [0], [1], [0, 0, 1, 1], [], []>} : vector<48x64xbf16>, vector<64x64xbf16>, vector<48x64xf32> -> vector<48x64xf32>
    %33 = arith.addf %29, %32 : vector<48x64xf32>
    %c0_32 = arith.constant 0 : index
    %c0_33 = arith.constant 0 : index
    %c0_34 = arith.constant 0 : index
    %34 = vector.load %arg13[%c0_32, %c0_33, %c0_34] : memref<1x64x64xbf16, #tpu.memory_space<vmem>>, vector<1x64x64xbf16>
    %35 = vector.shape_cast %34 : vector<1x64x64xbf16> to vector<64x64xbf16>
    %cst_35 = arith.constant dense<0.000000e+00> : vector<48x64xf32>
    %36 = tpu.matmul %11, %35, %cst_35 {dimension_numbers = #tpu.dot_dimension_numbers<[1], [0], [0], [1], [0, 0, 1, 1], [], []>} : vector<48x64xbf16>, vector<64x64xbf16>, vector<48x64xf32> -> vector<48x64xf32>
    %37 = arith.addf %33, %36 : vector<48x64xf32>
    %c0_36 = arith.constant 0 : index
    %c0_37 = arith.constant 0 : index
    %c0_38 = arith.constant 0 : index
    %38 = vector.load %arg14[%c0_36, %c0_37, %c0_38] : memref<1x1x64xf32, #tpu.memory_space<vmem>>, vector<1x1x64xf32>
    %39 = vector.shape_cast %38 : vector<1x1x64xf32> to vector<1x64xf32>
    %40 = vector.broadcast %39 : vector<1x64xf32> to vector<48x64xf32>
    %41 = arith.addf %37, %40 : vector<48x64xf32>
    %cst_39 = arith.constant 0.000000e+00 : f32
    %42 = vector.broadcast %cst_39 : f32 to vector<48x64xf32>
    %43 = arith.subf %42, %26 : vector<48x64xf32>
    %44 = math.exp %43 : vector<48x64xf32>
    %cst_40 = arith.constant 1.000000e+00 : f32
    %45 = vector.broadcast %cst_40 : f32 to vector<48x64xf32>
    %46 = arith.addf %45, %44 : vector<48x64xf32>
    %cst_41 = arith.constant 1.000000e+00 : f32
    %47 = vector.broadcast %cst_41 : f32 to vector<48x64xf32>
    %48 = arith.divf %47, %46 : vector<48x64xf32>
    %cst_42 = arith.constant 0.000000e+00 : f32
    %49 = vector.broadcast %cst_42 : f32 to vector<48x64xf32>
    %50 = arith.maximumf %41, %49 : vector<48x64xf32>
    %51 = math.absf %41 : vector<48x64xf32>
    %cst_43 = arith.constant 0.000000e+00 : f32
    %52 = vector.broadcast %cst_43 : f32 to vector<48x64xf32>
    %53 = arith.subf %52, %51 : vector<48x64xf32>
    %54 = math.exp %53 : vector<48x64xf32>
    %cst_44 = arith.constant 1.000000e+00 : f32
    %55 = vector.broadcast %cst_44 : f32 to vector<48x64xf32>
    %56 = arith.addf %55, %54 : vector<48x64xf32>
    %57 = math.log %56 : vector<48x64xf32>
    %58 = arith.addf %50, %57 : vector<48x64xf32>
    %59 = arith.mulf %48, %58 : vector<48x64xf32>
    %c0_45 = arith.constant 0 : index
    %c0_46 = arith.constant 0 : index
    %60 = vector.load %arg4[%c0_45, %c0_46] : memref<16x48xf32, #tpu.memory_space<vmem>>, vector<16x48xf32>
    %cst_47 = arith.constant dense<0.000000e+00> : vector<16x64xf32>
    %61 = tpu.matmul %60, %59, %cst_47 {dimension_numbers = #tpu.dot_dimension_numbers<[1], [0], [0], [1], [0, 0, 1, 1], [], []>} : vector<16x48xf32>, vector<48x64xf32>, vector<16x64xf32> -> vector<16x64xf32>
    %62 = arith.addf %3, %61 : vector<16x64xf32>
    %c0_48 = arith.constant 0 : index
    %c0_49 = arith.constant 0 : index
    %c0_50 = arith.constant 0 : index
    %63 = vector.load %arg15[%c0_48, %c0_49, %c0_50] : memref<1x1x64xf32, #tpu.memory_space<vmem>>, vector<1x1x64xf32>
    %64 = vector.shape_cast %63 : vector<1x1x64xf32> to vector<1x64xf32>
    %65 = vector.broadcast %64 : vector<1x64xf32> to vector<16x64xf32>
    %66 = arith.mulf %62, %65 : vector<16x64xf32>
    %c0_51 = arith.constant 0 : index
    %c0_52 = arith.constant 0 : index
    %c0_53 = arith.constant 0 : index
    %67 = vector.load %arg16[%c0_51, %c0_52, %c0_53] : memref<1x1x64xf32, #tpu.memory_space<vmem>>, vector<1x1x64xf32>
    %68 = vector.shape_cast %67 : vector<1x1x64xf32> to vector<1x64xf32>
    %69 = vector.broadcast %68 : vector<1x64xf32> to vector<16x64xf32>
    %70 = arith.addf %66, %69 : vector<16x64xf32>
    %cst_54 = arith.constant 0.000000e+00 : f32
    %71 = vector.broadcast %cst_54 : f32 to vector<16x64xf32>
    %72 = arith.maximumf %70, %71 : vector<16x64xf32>
    %c0_55 = arith.constant 0 : index
    %c0_56 = arith.constant 0 : index
    %73 = vector.load %arg23[%c0_55, %c0_56] : memref<16x64xf32, #tpu.memory_space<vmem>>, vector<16x64xf32>
    tpu.vector_store %arg23[%c0_55, %c0_56], %72 {strides = array<i32>} : memref<16x64xf32, #tpu.memory_space<vmem>>, vector<16x64xf32>,
    %c5_i32 = arith.constant 5 : i32
    %74 = arith.cmpi eq, %arg0, %c5_i32 : i32
    %75 = arith.extui %74 : i1 to i32
    %c0_i32_57 = arith.constant 0 : i32
    %76 = arith.cmpi ne, %75, %c0_i32_57 : i32
    scf.if %76 {
      %c0_58 = arith.constant 0 : index
      %c0_59 = arith.constant 0 : index
      %77 = vector.load %arg19[%c0_58, %c0_59] : memref<1x64xf32, #tpu.memory_space<vmem>>, vector<1x64xf32>
      %78 = vector.broadcast %77 : vector<1x64xf32> to vector<16x64xf32>
      %79 = arith.mulf %72, %78 : vector<16x64xf32>
      %cst_60 = arith.constant dense<0.000000e+00> : vector<16xf32>
      %80 = vector.multi_reduction <add>, %79, %cst_60 [1] : vector<16x64xf32> to vector<16xf32>
      %81 = vector.shape_cast %80 : vector<16xf32> to vector<16x1xf32>
      %c0_61 = arith.constant 0 : index
      %c0_62 = arith.constant 0 : index
      %82 = vector.load %arg20[%c0_61, %c0_62] : memref<1x1xf32, #tpu.memory_space<vmem>>, vector<1x1xf32>
      %83 = vector.broadcast %82 : vector<1x1xf32> to vector<16x1xf32>
      %84 = arith.addf %81, %83 : vector<16x1xf32>
      %c0_63 = arith.constant 0 : index
      %c0_64 = arith.constant 0 : index
      %85 = vector.load %arg22[%c0_63, %c0_64] : memref<16x1xf32, #tpu.memory_space<vmem>>, vector<16x1xf32>
      tpu.vector_store %arg22[%c0_63, %c0_64], %84 {strides = array<i32>} : memref<16x1xf32, #tpu.memory_space<vmem>>, vector<16x1xf32>,
      %c0_65 = arith.constant 0 : index
      %c0_66 = arith.constant 0 : index
      %86 = vector.load %arg6[%c0_65, %c0_66] : memref<2x16xf32, #tpu.memory_space<vmem>>, vector<2x16xf32>
      %cst_67 = arith.constant dense<0.000000e+00> : vector<2x64xf32>
      %87 = tpu.matmul %86, %72, %cst_67 {dimension_numbers = #tpu.dot_dimension_numbers<[1], [0], [0], [1], [0, 0, 1, 1], [], []>} : vector<2x16xf32>, vector<16x64xf32>, vector<2x64xf32> -> vector<2x64xf32>
      %88 = arith.truncf %87 : vector<2x64xf32> to vector<2x64xbf16>
      %c0_68 = arith.constant 0 : index
      %c0_69 = arith.constant 0 : index
      %89 = vector.load %arg17[%c0_68, %c0_69] : memref<64x256xbf16, #tpu.memory_space<vmem>>, vector<64x256xbf16>
      %cst_70 = arith.constant dense<0.000000e+00> : vector<2x256xf32>
      %90 = tpu.matmul %88, %89, %cst_70 {dimension_numbers = #tpu.dot_dimension_numbers<[1], [0], [0], [1], [0, 0, 1, 1], [], []>} : vector<2x64xbf16>, vector<64x256xbf16>, vector<2x256xf32> -> vector<2x256xf32>
      %c0_71 = arith.constant 0 : index
      %c0_72 = arith.constant 0 : index
      %91 = vector.load %arg18[%c0_71, %c0_72] : memref<1x256xf32, #tpu.memory_space<vmem>>, vector<1x256xf32>
      %92 = vector.broadcast %91 : vector<1x256xf32> to vector<2x256xf32>
      %93 = arith.addf %90, %92 : vector<2x256xf32>
      %c0_73 = arith.constant 0 : index
      %c0_74 = arith.constant 0 : index
      %94 = vector.load %arg21[%c0_73, %c0_74] : memref<2x256xf32, #tpu.memory_space<vmem>>, vector<2x256xf32>
      tpu.vector_store %arg21[%c0_73, %c0_74], %93 {strides = array<i32>} : memref<2x256xf32, #tpu.memory_space<vmem>>, vector<2x256xf32>,
    } else {
    }
    return
  }
  func.func @transform_0(%arg0: i32) -> (i32, i32) {
    %c0_i32 = arith.constant 0 : i32
    %c0_i32_0 = arith.constant 0 : i32
    %c0_i32_1 = arith.constant 0 : i32
    return %c0_i32, %c0_i32_0 : i32, i32
  }
  func.func @transform_1(%arg0: i32) -> (i32, i32) {
    %c0_i32 = arith.constant 0 : i32
    %c0_i32_0 = arith.constant 0 : i32
    %c0_i32_1 = arith.constant 0 : i32
    return %c0_i32, %c0_i32_0 : i32, i32
  }
  func.func @transform_2(%arg0: i32) -> (i32, i32) {
    %c0_i32 = arith.constant 0 : i32
    %c0_i32_0 = arith.constant 0 : i32
    %c0_i32_1 = arith.constant 0 : i32
    return %c0_i32, %c0_i32_0 : i32, i32
  }
  func.func @transform_3(%arg0: i32) -> (i32, i32) {
    %c0_i32 = arith.constant 0 : i32
    %c0_i32_0 = arith.constant 0 : i32
    %c0_i32_1 = arith.constant 0 : i32
    return %c0_i32, %c0_i32_0 : i32, i32
  }
  func.func @transform_4(%arg0: i32) -> (i32, i32) {
    %c0_i32 = arith.constant 0 : i32
    %c0_i32_0 = arith.constant 0 : i32
    %c0_i32_1 = arith.constant 0 : i32
    return %c0_i32, %c0_i32_0 : i32, i32
  }
  func.func @transform_5(%arg0: i32) -> (i32, i32) {
    %c0_i32 = arith.constant 0 : i32
    %c0_i32_0 = arith.constant 0 : i32
    %c0_i32_1 = arith.constant 0 : i32
    return %c0_i32, %c0_i32_0 : i32, i32
  }
  func.func @transform_6(%arg0: i32) -> (i32, i32, i32) {
    %c0_i32 = arith.constant 0 : i32
    %c0_i32_0 = arith.constant 0 : i32
    %c0_i32_1 = arith.constant 0 : i32
    return %arg0, %c0_i32, %c0_i32_0 : i32, i32, i32
  }
  func.func @transform_7(%arg0: i32) -> (i32, i32, i32) {
    %c0_i32 = arith.constant 0 : i32
    %c0_i32_0 = arith.constant 0 : i32
    %c0_i32_1 = arith.constant 0 : i32
    return %arg0, %c0_i32, %c0_i32_0 : i32, i32, i32
  }
  func.func @transform_8(%arg0: i32) -> (i32, i32, i32) {
    %c0_i32 = arith.constant 0 : i32
    %c0_i32_0 = arith.constant 0 : i32
    %c0_i32_1 = arith.constant 0 : i32
    return %arg0, %c0_i32, %c0_i32_0 : i32, i32, i32
  }
  func.func @transform_9(%arg0: i32) -> (i32, i32, i32) {
    %c0_i32 = arith.constant 0 : i32
    %c0_i32_0 = arith.constant 0 : i32
    %c0_i32_1 = arith.constant 0 : i32
    return %arg0, %c0_i32, %c0_i32_0 : i32, i32, i32
  }
  func.func @transform_10(%arg0: i32) -> (i32, i32, i32) {
    %c0_i32 = arith.constant 0 : i32
    %c0_i32_0 = arith.constant 0 : i32
    %c0_i32_1 = arith.constant 0 : i32
    return %arg0, %c0_i32, %c0_i32_0 : i32, i32, i32
  }
  func.func @transform_11(%arg0: i32) -> (i32, i32, i32) {
    %c0_i32 = arith.constant 0 : i32
    %c0_i32_0 = arith.constant 0 : i32
    %c0_i32_1 = arith.constant 0 : i32
    return %arg0, %c0_i32, %c0_i32_0 : i32, i32, i32
  }
  func.func @transform_12(%arg0: i32) -> (i32, i32, i32) {
    %c0_i32 = arith.constant 0 : i32
    %c0_i32_0 = arith.constant 0 : i32
    %c0_i32_1 = arith.constant 0 : i32
    return %arg0, %c0_i32, %c0_i32_0 : i32, i32, i32
  }
  func.func @transform_13(%arg0: i32) -> (i32, i32, i32) {
    %c0_i32 = arith.constant 0 : i32
    %c0_i32_0 = arith.constant 0 : i32
    %c0_i32_1 = arith.constant 0 : i32
    return %arg0, %c0_i32, %c0_i32_0 : i32, i32, i32
  }
  func.func @transform_14(%arg0: i32) -> (i32, i32, i32) {
    %c0_i32 = arith.constant 0 : i32
    %c0_i32_0 = arith.constant 0 : i32
    %c0_i32_1 = arith.constant 0 : i32
    return %arg0, %c0_i32, %c0_i32_0 : i32, i32, i32
  }
  func.func @transform_15(%arg0: i32) -> (i32, i32, i32) {
    %c0_i32 = arith.constant 0 : i32
    %c0_i32_0 = arith.constant 0 : i32
    %c0_i32_1 = arith.constant 0 : i32
    return %arg0, %c0_i32, %c0_i32_0 : i32, i32, i32
  }
  func.func @transform_16(%arg0: i32) -> (i32, i32) {
    %c0_i32 = arith.constant 0 : i32
    %c0_i32_0 = arith.constant 0 : i32
    %c0_i32_1 = arith.constant 0 : i32
    return %c0_i32, %c0_i32_0 : i32, i32
  }
  func.func @transform_17(%arg0: i32) -> (i32, i32) {
    %c0_i32 = arith.constant 0 : i32
    %c0_i32_0 = arith.constant 0 : i32
    %c0_i32_1 = arith.constant 0 : i32
    return %c0_i32, %c0_i32_0 : i32, i32
  }
  func.func @transform_18(%arg0: i32) -> (i32, i32) {
    %c0_i32 = arith.constant 0 : i32
    %c0_i32_0 = arith.constant 0 : i32
    %c0_i32_1 = arith.constant 0 : i32
    return %c0_i32, %c0_i32_0 : i32, i32
  }
  func.func @transform_19(%arg0: i32) -> (i32, i32) {
    %c0_i32 = arith.constant 0 : i32
    %c0_i32_0 = arith.constant 0 : i32
    %c0_i32_1 = arith.constant 0 : i32
    return %c0_i32, %c0_i32_0 : i32, i32
  }
  func.func @transform_20(%arg0: i32) -> (i32, i32) {
    %c0_i32 = arith.constant 0 : i32
    %c0_i32_0 = arith.constant 0 : i32
    %c0_i32_1 = arith.constant 0 : i32
    return %c0_i32, %c0_i32_0 : i32, i32
  }
  func.func @transform_21(%arg0: i32) -> (i32, i32) {
    %c0_i32 = arith.constant 0 : i32
    %c0_i32_0 = arith.constant 0 : i32
    %c0_i32_1 = arith.constant 0 : i32
    return %c0_i32, %c0_i32_0 : i32, i32
  }
}

</mosaic_0001>

<llo_original>
// kernel: tpu_custom_call.1
$region0: #{tpu_custom_call.1}
  #allocation0 [shape = 'u32[]', space=smem, size = 0x4, offset = 0x4, fixed_abs, tag = 'smem constant byte address 0x4 - core index']
  #allocation1 [shape = 'u32[144,128]{1,0:T(1,128)}', space=vmem, size = 0x12000, scoped, tag = 'internal scratch']
  #allocation2 [shape = 'f32[16,64]{1,0:T(8,128)}', space=vmem, size = 0x2000, scoped, tag = 'scratch operand']
  #allocation3 [shape = 'f32[1,1]{1,0:T(1,128)S(1)}', space=vmem, size = 0x200, scoped, tag = 'scoped memory for tpu_custom_call.1']
  %s0 = inlined_call_operand.hbm [shape: f32[16,64], index: 0, kind: input, shape index: {}]
  %s1 = inlined_call_operand.vmem [shape: f32[48,16], index: 1, kind: input, shape index: {}]
  %s2 = inlined_call_operand.vmem [shape: f32[48,16], index: 2, kind: input, shape index: {}]
  %s3 = inlined_call_operand.hbm [shape: f32[16,48], index: 3, kind: input, shape index: {}]
  %s4 = inlined_call_operand.vmem [shape: f32[48,64], index: 4, kind: input, shape index: {}]
  %s5 = inlined_call_operand.hbm [shape: f32[2,16], index: 5, kind: input, shape index: {}]
  %s6 = inlined_call_operand.hbm [shape: bf16[6,64,64], index: 6, kind: input, shape index: {}]
  %s7 = inlined_call_operand.hbm [shape: bf16[6,64,64], index: 7, kind: input, shape index: {}]
  %s8 = inlined_call_operand.hbm [shape: bf16[6,64,64], index: 8, kind: input, shape index: {}]
  %s9 = inlined_call_operand.vmem [shape: f32[6,1,64], index: 9, kind: input, shape index: {}]
  %s10 = inlined_call_operand.hbm [shape: bf16[6,64,64], index: 10, kind: input, shape index: {}]
  %s11 = inlined_call_operand.hbm [shape: bf16[6,64,64], index: 11, kind: input, shape index: {}]
  %s12 = inlined_call_operand.hbm [shape: bf16[6,64,64], index: 12, kind: input, shape index: {}]
  %s13 = inlined_call_operand.vmem [shape: f32[6,1,64], index: 13, kind: input, shape index: {}]
  %s14 = inlined_call_operand.vmem [shape: f32[6,1,64], index: 14, kind: input, shape index: {}]
  %s15 = inlined_call_operand.vmem [shape: f32[6,1,64], index: 15, kind: input, shape index: {}]
  %s16 = inlined_call_operand.vmem [shape: bf16[64,256], index: 16, kind: input, shape index: {}]
  %s17 = inlined_call_operand.vmem [shape: f32[1,256], index: 17, kind: input, shape index: {}]
  %s18 = inlined_call_operand.vmem [shape: f32[1,64], index: 18, kind: input, shape index: {}]
  %s19 = inlined_call_operand.<no memory space> [shape: f32[1,1], index: 19, kind: input, shape index: {}]
  %s20 = inlined_call_operand.hbm [shape: f32[2,256], index: 20, kind: output, shape index: {0}]
  %s21 = inlined_call_operand.vmem [shape: f32[16,1], index: 21, kind: output, shape index: {1}]
  %22 = xla_tuple %s20, %s21
  %s23 = sld [smem:[#allocation0]]
  $region165: #{tpu_custom_call.1} parent=0
    _
  %s25 = ssub.s32 1, %s23
  %s26 = scalar_select 0, %s25, %s23
  %v27 = vstv %s19
  %28 = vst [vmem:[#allocation3] sm:$0x1] %v27
  $region1: #{tpu_custom_call.1} parent=0
    #allocation4 [shape = 'u8[8192]{0}', space=vmem, size = 0x2000, scoped, tag = 'input window, operand 0, single buffered']
    #allocation5 [shape = 's32[2]{0}', space=sflag, size = 0x8, scoped, tag = 'scoped memory for tpu_custom_call.1']
    #allocation6 [shape = 's32[2]{0}', space=sflag, size = 0x8, scoped, tag = 'scoped memory for tpu_custom_call.1']
    #allocation7 [shape = 'u8[8192]{0}', space=vmem, size = 0x2000, scoped, tag = 'input window, operand 3, single buffered']
    #allocation8 [shape = 's32[1]{0}', space=sflag, size = 0x4, scoped, tag = 'scoped memory for tpu_custom_call.1']
    #allocation9 [shape = 'u8[1024]{0}', space=vmem, size = 0x400, scoped, tag = 'input window, operand 5, single buffered']
    #allocation10 [shape = 'u8[32768]{0}', space=vmem, size = 0x8000, scoped, tag = 'input window, operand 6']
    #allocation11 [shape = 's32[2]{0}', space=sflag, size = 0x8, scoped, tag = 'scoped memory for tpu_custom_call.1']
    #allocation12 [shape = 'u8[32768]{0}', space=vmem, size = 0x8000, scoped, tag = 'input window, operand 7']
    #allocation13 [shape = 'u8[32768]{0}', space=vmem, size = 0x8000, scoped, tag = 'input window, operand 8']
    #allocation14 [shape = 's32[2]{0}', space=sflag, size = 0x8, scoped, tag = 'scoped memory for tpu_custom_call.1']
    #allocation15 [shape = 'u8[32768]{0}', space=vmem, size = 0x8000, scoped, tag = 'input window, operand 10']
    #allocation16 [shape = 'u8[32768]{0}', space=vmem, size = 0x8000, scoped, tag = 'input window, operand 11']
    #allocation17 [shape = 's32[2]{0}', space=sflag, size = 0x8, scoped, tag = 'scoped memory for tpu_custom_call.1']
    #allocation18 [shape = 'u8[32768]{0}', space=vmem, size = 0x8000, scoped, tag = 'input window, operand 12']
    #allocation19 [shape = 'u8[2048]{0}', space=vmem, size = 0x800, scoped, tag = 'output window, operand 0, single buffered']
    %29 = vsyncpa [#allocation5], 0
    %30 = vsyncpa [#allocation8], 0
    %31 = vsyncpa [#allocation11], 0
    %s32 = scalar_lea.sflag [#allocation11], 1
    %33 = vsyncpa %s32, 0
    %34 = vsyncpa [#allocation14], 0
    %s35 = scalar_lea.sflag [#allocation14], 1
    %36 = vsyncpa %s35, 0
    %37 = vsyncpa [#allocation17], 0
    %s38 = scalar_lea.sflag [#allocation17], 1
    %39 = vsyncpa %s38, 0
    %40 = vsyncpa [#allocation6], 0
    loop: start=0, step=1, limit=8
    $region2: #{tpu_custom_call.1} parent=1 // loop_pre_header
      _
    $region3: #{tpu_custom_call.1} parent=1 // loop_header
      %s42 = sphi 0, %s46
      %p43 = scmp.ge.s32.totalorder %s42, 8
      %s50 = sphi 0, %s50
      %s52 = sphi 0, %s50
      %s53 = sphi 0, %s52
      %s67 = sphi 0, %s53
      %s71 = sphi 0, %s71
      %s73 = sphi 0, %s71
      %s74 = sphi 0, %s73
      %s88 = sphi 0, %s74
      %s92 = sphi 0, %s92
      %s94 = sphi 0, %s92
      %s95 = sphi 0, %s94
      %s109 = sphi 0, %s95
      %s113 = sphi 0, %s113
      %s115 = sphi 0, %s113
      %s116 = sphi 0, %s115
      %s130 = sphi 0, %s116
      %s134 = sphi 0, %s134
      %s136 = sphi 0, %s134
      %s137 = sphi 0, %s136
      %s151 = sphi 0, %s137
      %s155 = sphi 0, %s155
      %s157 = sphi 0, %s155
      %s158 = sphi 0, %s157
      %s172 = sphi 0, %s158
      %s178 = sphi 0, %s180
      %s181 = sphi 0, %s178
      %s182 = sphi 0, %s181
      %s198 = sphi 0, %s182
      %s204 = sphi 0, %s206
      %s207 = sphi 0, %s204
      %s208 = sphi 0, %s207
      %s224 = sphi 0, %s208
      %s230 = sphi 0, %s232
      %s233 = sphi 0, %s230
      %s234 = sphi 0, %s233
      %s250 = sphi 0, %s234
      %s256 = sphi 0, %s258
      %s259 = sphi 0, %s256
      %s260 = sphi 0, %s259
      %s276 = sphi 0, %s260
      %s282 = sphi 0, %s284
      %s285 = sphi 0, %s282
      %s286 = sphi 0, %s285
      %s302 = sphi 0, %s286
      %s308 = sphi 0, %s310
      %s311 = sphi 0, %s308
      %s312 = sphi 0, %s311
      %s328 = sphi 0, %s312
      %s334 = sphi 0, %s336
      %s337 = sphi 0, %s334
      %s338 = sphi 0, %s337
      %s354 = sphi 0, %s338
      %s360 = sphi 0, %s362
      %s363 = sphi 0, %s360
      %s364 = sphi 0, %s363
      %s380 = sphi 0, %s364
      %s386 = sphi 0, %s388
      %s389 = sphi 0, %s386
      %s390 = sphi 0, %s389
      %s406 = sphi 0, %s390
      %s412 = sphi 0, %s414
      %s415 = sphi 0, %s412
      %s416 = sphi 0, %s415
      %s432 = sphi 0, %s416
      %s436 = sphi 0, %s436
      %s438 = sphi 0, %s436
      %s439 = sphi 0, %s438
      %s453 = sphi 0, %s439
      %s457 = sphi 0, %s457
      %s459 = sphi 0, %s457
      %s460 = sphi 0, %s459
      %s474 = sphi 0, %s460
      %s478 = sphi 0, %s478
      %s480 = sphi 0, %s478
      %s481 = sphi 0, %s480
      %s495 = sphi 0, %s481
      %s499 = sphi 0, %s499
      %s501 = sphi 0, %s499
      %s502 = sphi 0, %s501
      %s516 = sphi 0, %s502
      %s520 = sphi 0, %s520
      %s522 = sphi 0, %s520
      %s523 = sphi 0, %s522
      %s537 = sphi 0, %s523
      %s541 = sphi 0, %s541
      %s543 = sphi 0, %s541
      %s544 = sphi 0, %s543
      %s558 = sphi 0, %s544
    $region4: #{tpu_custom_call.1} parent=1 // loop_header_branch
      %45 = sbr.rel (%p43) target = $region8
    $region5: #{tpu_custom_call.1} parent=1 // loop_body
      %s47 = ssub.s32 %s42, 1
      %s48 = ssub.s32 %s42, 2
      %s49 = sadd.s32 %s42, 1
      %s51 = sadd.s32 %s50, 1
      %p54 = scmp.eq.s32.totalorder %s42, 5
      %p55 = scmp.ne.s32.totalorder %s50, %s52
      %p56 = scmp.eq.s32.totalorder %s42, 0
      %p57 = por %p55, %p56
      %p58 = scmp.ne.s32.totalorder %s50, %s52
      %p59 = scmp.eq.s32.totalorder %s47, 5
      %p60 = por %p58, %p59
      %p61 = scmp.ne.s32.totalorder %s52, %s53
      %p62 = scmp.eq.s32.totalorder %s47, 0
      %p63 = por %p61, %p62
      %p64 = scmp.ne.s32.totalorder %s52, %s53
      %p65 = scmp.eq.s32.totalorder %s48, 5
      %p66 = por %p64, %p65
      %p68 = scmp.ne.s32.totalorder %s53, %s67
      %p69 = scmp.eq.s32.totalorder %s48, 0
      %p70 = por %p68, %p69
      %s72 = sadd.s32 %s71, 1
      %p75 = scmp.eq.s32.totalorder %s42, 5
      %p76 = scmp.ne.s32.totalorder %s71, %s73
      %p77 = scmp.eq.s32.totalorder %s42, 0
      %p78 = por %p76, %p77
      %p79 = scmp.ne.s32.totalorder %s71, %s73
      %p80 = scmp.eq.s32.totalorder %s47, 5
      %p81 = por %p79, %p80
      %p82 = scmp.ne.s32.totalorder %s73, %s74
      %p83 = scmp.eq.s32.totalorder %s47, 0
      %p84 = por %p82, %p83
      %p85 = scmp.ne.s32.totalorder %s73, %s74
      %p86 = scmp.eq.s32.totalorder %s48, 5
      %p87 = por %p85, %p86
      %p89 = scmp.ne.s32.totalorder %s74, %s88
      %p90 = scmp.eq.s32.totalorder %s48, 0
      %p91 = por %p89, %p90
      %s93 = sadd.s32 %s92, 1
      %p96 = scmp.eq.s32.totalorder %s42, 5
      %p97 = scmp.ne.s32.totalorder %s92, %s94
      %p98 = scmp.eq.s32.totalorder %s42, 0
      %p99 = por %p97, %p98
      %p100 = scmp.ne.s32.totalorder %s92, %s94
      %p101 = scmp.eq.s32.totalorder %s47, 5
      %p102 = por %p100, %p101
      %p103 = scmp.ne.s32.totalorder %s94, %s95
      %p104 = scmp.eq.s32.totalorder %s47, 0
      %p105 = por %p103, %p104
      %p106 = scmp.ne.s32.totalorder %s94, %s95
      %p107 = scmp.eq.s32.totalorder %s48, 5
      %p108 = por %p106, %p107
      %p110 = scmp.ne.s32.totalorder %s95, %s109
      %p111 = scmp.eq.s32.totalorder %s48, 0
      %p112 = por %p110, %p111
      %s114 = sadd.s32 %s113, 1
      %p117 = scmp.eq.s32.totalorder %s42, 5
      %p118 = scmp.ne.s32.totalorder %s113, %s115
      %p119 = scmp.eq.s32.totalorder %s42, 0
      %p120 = por %p118, %p119
      %p121 = scmp.ne.s32.totalorder %s113, %s115
      %p122 = scmp.eq.s32.totalorder %s47, 5
      %p123 = por %p121, %p122
      %p124 = scmp.ne.s32.totalorder %s115, %s116
      %p125 = scmp.eq.s32.totalorder %s47, 0
      %p126 = por %p124, %p125
      %p127 = scmp.ne.s32.totalorder %s115, %s116
      %p128 = scmp.eq.s32.totalorder %s48, 5
      %p129 = por %p127, %p128
      %p131 = scmp.ne.s32.totalorder %s116, %s130
      %p132 = scmp.eq.s32.totalorder %s48, 0
      %p133 = por %p131, %p132
      %s135 = sadd.s32 %s134, 1
      %p138 = scmp.eq.s32.totalorder %s42, 5
      %p139 = scmp.ne.s32.totalorder %s134, %s136
      %p140 = scmp.eq.s32.totalorder %s42, 0
      %p141 = por %p139, %p140
      %p142 = scmp.ne.s32.totalorder %s134, %s136
      %p143 = scmp.eq.s32.totalorder %s47, 5
      %p144 = por %p142, %p143
      %p145 = scmp.ne.s32.totalorder %s136, %s137
      %p146 = scmp.eq.s32.totalorder %s47, 0
      %p147 = por %p145, %p146
      %p148 = scmp.ne.s32.totalorder %s136, %s137
      %p149 = scmp.eq.s32.totalorder %s48, 5
      %p150 = por %p148, %p149
      %p152 = scmp.ne.s32.totalorder %s137, %s151
      %p153 = scmp.eq.s32.totalorder %s48, 0
      %p154 = por %p152, %p153
      %s156 = sadd.s32 %s155, 1
      %p159 = scmp.eq.s32.totalorder %s42, 5
      %p160 = scmp.ne.s32.totalorder %s155, %s157
      %p161 = scmp.eq.s32.totalorder %s42, 0
      %p162 = por %p160, %p161
      %p163 = scmp.ne.s32.totalorder %s155, %s157
      %p164 = scmp.eq.s32.totalorder %s47, 5
      %p165 = por %p163, %p164
      %p166 = scmp.ne.s32.totalorder %s157, %s158
      %p167 = scmp.eq.s32.totalorder %s47, 0
      %p168 = por %p166, %p167
      %p169 = scmp.ne.s32.totalorder %s157, %s158
      %p170 = scmp.eq.s32.totalorder %s48, 5
      %p171 = por %p169, %p170
      %p173 = scmp.ne.s32.totalorder %s158, %s172
      %p174 = scmp.eq.s32.totalorder %s48, 0
      %p175 = por %p173, %p174
      %s176 = ssub.s32 %s42, %s49
      %p177 = scmp.eq.s32.totalorder %s176, 0
      %s179 = sadd.s32 %s178, 1
      %s180 = scalar_select %p177, %s178, %s179
      %p183 = pneg %p177
      %p184 = scmp.eq.s32.totalorder %s42, 5
      %p185 = por %p183, %p184
      %p186 = scmp.ne.s32.totalorder %s178, %s181
      %p187 = scmp.eq.s32.totalorder %s42, 0
      %p188 = por %p186, %p187
      %p189 = scmp.ne.s32.totalorder %s178, %s181
      %p190 = scmp.eq.s32.totalorder %s47, 5
      %p191 = por %p189, %p190
      %p192 = scmp.ne.s32.totalorder %s181, %s182
      %p193 = scmp.eq.s32.totalorder %s47, 0
      %p194 = por %p192, %p193
      %p195 = scmp.ne.s32.totalorder %s181, %s182
      %p196 = scmp.eq.s32.totalorder %s48, 5
      %p197 = por %p195, %p196
      %p199 = scmp.ne.s32.totalorder %s182, %s198
      %p200 = scmp.eq.s32.totalorder %s48, 0
      %p201 = por %p199, %p200
      %s202 = ssub.s32 %s42, %s49
      %p203 = scmp.eq.s32.totalorder %s202, 0
      %s205 = sadd.s32 %s204, 1
      %s206 = scalar_select %p203, %s204, %s205
      %p209 = pneg %p203
      %p210 = scmp.eq.s32.totalorder %s42, 5
      %p211 = por %p209, %p210
      %p212 = scmp.ne.s32.totalorder %s204, %s207
      %p213 = scmp.eq.s32.totalorder %s42, 0
      %p214 = por %p212, %p213
      %p215 = scmp.ne.s32.totalorder %s204, %s207
      %p216 = scmp.eq.s32.totalorder %s47, 5
      %p217 = por %p215, %p216
      %p218 = scmp.ne.s32.totalorder %s207, %s208
      %p219 = scmp.eq.s32.totalorder %s47, 0
      %p220 = por %p218, %p219
      %p221 = scmp.ne.s32.totalorder %s207, %s208
      %p222 = scmp.eq.s32.totalorder %s48, 5
      %p223 = por %p221, %p222
      %p225 = scmp.ne.s32.totalorder %s208, %s224
      %p226 = scmp.eq.s32.totalorder %s48, 0
      %p227 = por %p225, %p226
      %s228 = ssub.s32 %s42, %s49
      %p229 = scmp.eq.s32.totalorder %s228, 0
      %s231 = sadd.s32 %s230, 1
      %s232 = scalar_select %p229, %s230, %s231
      %p235 = pneg %p229
      %p236 = scmp.eq.s32.totalorder %s42, 5
      %p237 = por %p235, %p236
      %p238 = scmp.ne.s32.totalorder %s230, %s233
      %p239 = scmp.eq.s32.totalorder %s42, 0
      %p240 = por %p238, %p239
      %p241 = scmp.ne.s32.totalorder %s230, %s233
      %p242 = scmp.eq.s32.totalorder %s47, 5
      %p243 = por %p241, %p242
      %p244 = scmp.ne.s32.totalorder %s233, %s234
      %p245 = scmp.eq.s32.totalorder %s47, 0
      %p246 = por %p244, %p245
      %p247 = scmp.ne.s32.totalorder %s233, %s234
      %p248 = scmp.eq.s32.totalorder %s48, 5
      %p249 = por %p247, %p248
      %p251 = scmp.ne.s32.totalorder %s234, %s250
      %p252 = scmp.eq.s32.totalorder %s48, 0
      %p253 = por %p251, %p252
      %s254 = ssub.s32 %s42, %s49
      %p255 = scmp.eq.s32.totalorder %s254, 0
      %s257 = sadd.s32 %s256, 1
      %s258 = scalar_select %p255, %s256, %s257
      %p261 = pneg %p255
      %p262 = scmp.eq.s32.totalorder %s42, 5
      %p263 = por %p261, %p262
      %p264 = scmp.ne.s32.totalorder %s256, %s259
      %p265 = scmp.eq.s32.totalorder %s42, 0
      %p266 = por %p264, %p265
      %p267 = scmp.ne.s32.totalorder %s256, %s259
      %p268 = scmp.eq.s32.totalorder %s47, 5
      %p269 = por %p267, %p268
      %p270 = scmp.ne.s32.totalorder %s259, %s260
      %p271 = scmp.eq.s32.totalorder %s47, 0
      %p272 = por %p270, %p271
      %p273 = scmp.ne.s32.totalorder %s259, %s260
      %p274 = scmp.eq.s32.totalorder %s48, 5
      %p275 = por %p273, %p274
      %p277 = scmp.ne.s32.totalorder %s260, %s276
      %p278 = scmp.eq.s32.totalorder %s48, 0
      %p279 = por %p277, %p278
      %s280 = ssub.s32 %s42, %s49
      %p281 = scmp.eq.s32.totalorder %s280, 0
      %s283 = sadd.s32 %s282, 1
      %s284 = scalar_select %p281, %s282, %s283
      %p287 = pneg %p281
      %p288 = scmp.eq.s32.totalorder %s42, 5
      %p289 = por %p287, %p288
      %p290 = scmp.ne.s32.totalorder %s282, %s285
      %p291 = scmp.eq.s32.totalorder %s42, 0
      %p292 = por %p290, %p291
      %p293 = scmp.ne.s32.totalorder %s282, %s285
      %p294 = scmp.eq.s32.totalorder %s47, 5
      %p295 = por %p293, %p294
      %p296 = scmp.ne.s32.totalorder %s285, %s286
      %p297 = scmp.eq.s32.totalorder %s47, 0
      %p298 = por %p296, %p297
      %p299 = scmp.ne.s32.totalorder %s285, %s286
      %p300 = scmp.eq.s32.totalorder %s48, 5
      %p301 = por %p299, %p300
      %p303 = scmp.ne.s32.totalorder %s286, %s302
      %p304 = scmp.eq.s32.totalorder %s48, 0
      %p305 = por %p303, %p304
      %s306 = ssub.s32 %s42, %s49
      %p307 = scmp.eq.s32.totalorder %s306, 0
      %s309 = sadd.s32 %s308, 1
      %s310 = scalar_select %p307, %s308, %s309
      %p313 = pneg %p307
      %p314 = scmp.eq.s32.totalorder %s42, 5
      %p315 = por %p313, %p314
      %p316 = scmp.ne.s32.totalorder %s308, %s311
      %p317 = scmp.eq.s32.totalorder %s42, 0
      %p318 = por %p316, %p317
      %p319 = scmp.ne.s32.totalorder %s308, %s311
      %p320 = scmp.eq.s32.totalorder %s47, 5
      %p321 = por %p319, %p320
      %p322 = scmp.ne.s32.totalorder %s311, %s312
      %p323 = scmp.eq.s32.totalorder %s47, 0
      %p324 = por %p322, %p323
      %p325 = scmp.ne.s32.totalorder %s311, %s312
      %p326 = scmp.eq.s32.totalorder %s48, 5
      %p327 = por %p325, %p326
      %p329 = scmp.ne.s32.totalorder %s312, %s328
      %p330 = scmp.eq.s32.totalorder %s48, 0
      %p331 = por %p329, %p330
      %s332 = ssub.s32 %s42, %s49
      %p333 = scmp.eq.s32.totalorder %s332, 0
      %s335 = sadd.s32 %s334, 1
      %s336 = scalar_select %p333, %s334, %s335
      %p339 = pneg %p333
      %p340 = scmp.eq.s32.totalorder %s42, 5
      %p341 = por %p339, %p340
      %p342 = scmp.ne.s32.totalorder %s334, %s337
      %p343 = scmp.eq.s32.totalorder %s42, 0
      %p344 = por %p342, %p343
      %p345 = scmp.ne.s32.totalorder %s334, %s337
      %p346 = scmp.eq.s32.totalorder %s47, 5
      %p347 = por %p345, %p346
      %p348 = scmp.ne.s32.totalorder %s337, %s338
      %p349 = scmp.eq.s32.totalorder %s47, 0
      %p350 = por %p348, %p349
      %p351 = scmp.ne.s32.totalorder %s337, %s338
      %p352 = scmp.eq.s32.totalorder %s48, 5
      %p353 = por %p351, %p352
      %p355 = scmp.ne.s32.totalorder %s338, %s354
      %p356 = scmp.eq.s32.totalorder %s48, 0
      %p357 = por %p355, %p356
      %s358 = ssub.s32 %s42, %s49
      %p359 = scmp.eq.s32.totalorder %s358, 0
      %s361 = sadd.s32 %s360, 1
      %s362 = scalar_select %p359, %s360, %s361
      %p365 = pneg %p359
      %p366 = scmp.eq.s32.totalorder %s42, 5
      %p367 = por %p365, %p366
      %p368 = scmp.ne.s32.totalorder %s360, %s363
      %p369 = scmp.eq.s32.totalorder %s42, 0
      %p370 = por %p368, %p369
      %p371 = scmp.ne.s32.totalorder %s360, %s363
      %p372 = scmp.eq.s32.totalorder %s47, 5
      %p373 = por %p371, %p372
      %p374 = scmp.ne.s32.totalorder %s363, %s364
      %p375 = scmp.eq.s32.totalorder %s47, 0
      %p376 = por %p374, %p375
      %p377 = scmp.ne.s32.totalorder %s363, %s364
      %p378 = scmp.eq.s32.totalorder %s48, 5
      %p379 = por %p377, %p378
      %p381 = scmp.ne.s32.totalorder %s364, %s380
      %p382 = scmp.eq.s32.totalorder %s48, 0
      %p383 = por %p381, %p382
      %s384 = ssub.s32 %s42, %s49
      %p385 = scmp.eq.s32.totalorder %s384, 0
      %s387 = sadd.s32 %s386, 1
      %s388 = scalar_select %p385, %s386, %s387
      %p391 = pneg %p385
      %p392 = scmp.eq.s32.totalorder %s42, 5
      %p393 = por %p391, %p392
      %p394 = scmp.ne.s32.totalorder %s386, %s389
      %p395 = scmp.eq.s32.totalorder %s42, 0
      %p396 = por %p394, %p395
      %p397 = scmp.ne.s32.totalorder %s386, %s389
      %p398 = scmp.eq.s32.totalorder %s47, 5
      %p399 = por %p397, %p398
      %p400 = scmp.ne.s32.totalorder %s389, %s390
      %p401 = scmp.eq.s32.totalorder %s47, 0
      %p402 = por %p400, %p401
      %p403 = scmp.ne.s32.totalorder %s389, %s390
      %p404 = scmp.eq.s32.totalorder %s48, 5
      %p405 = por %p403, %p404
      %p407 = scmp.ne.s32.totalorder %s390, %s406
      %p408 = scmp.eq.s32.totalorder %s48, 0
      %p409 = por %p407, %p408
      %s410 = ssub.s32 %s42, %s49
      %p411 = scmp.eq.s32.totalorder %s410, 0
      %s413 = sadd.s32 %s412, 1
      %s414 = scalar_select %p411, %s412, %s413
      %p417 = pneg %p411
      %p418 = scmp.eq.s32.totalorder %s42, 5
      %p419 = por %p417, %p418
      %p420 = scmp.ne.s32.totalorder %s412, %s415
      %p421 = scmp.eq.s32.totalorder %s42, 0
      %p422 = por %p420, %p421
      %p423 = scmp.ne.s32.totalorder %s412, %s415
      %p424 = scmp.eq.s32.totalorder %s47, 5
      %p425 = por %p423, %p424
      %p426 = scmp.ne.s32.totalorder %s415, %s416
      %p427 = scmp.eq.s32.totalorder %s47, 0
      %p428 = por %p426, %p427
      %p429 = scmp.ne.s32.totalorder %s415, %s416
      %p430 = scmp.eq.s32.totalorder %s48, 5
      %p431 = por %p429, %p430
      %p433 = scmp.ne.s32.totalorder %s416, %s432
      %p434 = scmp.eq.s32.totalorder %s48, 0
      %p435 = por %p433, %p434
      %s437 = sadd.s32 %s436, 1
      %p440 = scmp.eq.s32.totalorder %s42, 5
      %p441 = scmp.ne.s32.totalorder %s436, %s438
      %p442 = scmp.eq.s32.totalorder %s42, 0
      %p443 = por %p441, %p442
      %p444 = scmp.ne.s32.totalorder %s436, %s438
      %p445 = scmp.eq.s32.totalorder %s47, 5
      %p446 = por %p444, %p445
      %p447 = scmp.ne.s32.totalorder %s438, %s439
      %p448 = scmp.eq.s32.totalorder %s47, 0
      %p449 = por %p447, %p448
      %p450 = scmp.ne.s32.totalorder %s438, %s439
      %p451 = scmp.eq.s32.totalorder %s48, 5
      %p452 = por %p450, %p451
      %p454 = scmp.ne.s32.totalorder %s439, %s453
      %p455 = scmp.eq.s32.totalorder %s48, 0
      %p456 = por %p454, %p455
      %s458 = sadd.s32 %s457, 1
      %p461 = scmp.eq.s32.totalorder %s42, 5
      %p462 = scmp.ne.s32.totalorder %s457, %s459
      %p463 = scmp.eq.s32.totalorder %s42, 0
      %p464 = por %p462, %p463
      %p465 = scmp.ne.s32.totalorder %s457, %s459
      %p466 = scmp.eq.s32.totalorder %s47, 5
      %p467 = por %p465, %p466
      %p468 = scmp.ne.s32.totalorder %s459, %s460
      %p469 = scmp.eq.s32.totalorder %s47, 0
      %p470 = por %p468, %p469
      %p471 = scmp.ne.s32.totalorder %s459, %s460
      %p472 = scmp.eq.s32.totalorder %s48, 5
      %p473 = por %p471, %p472
      %p475 = scmp.ne.s32.totalorder %s460, %s474
      %p476 = scmp.eq.s32.totalorder %s48, 0
      %p477 = por %p475, %p476
      %s479 = sadd.s32 %s478, 1
      %p482 = scmp.eq.s32.totalorder %s42, 5
      %p483 = scmp.ne.s32.totalorder %s478, %s480
      %p484 = scmp.eq.s32.totalorder %s42, 0
      %p485 = por %p483, %p484
      %p486 = scmp.ne.s32.totalorder %s478, %s480
      %p487 = scmp.eq.s32.totalorder %s47, 5
      %p488 = por %p486, %p487
      %p489 = scmp.ne.s32.totalorder %s480, %s481
      %p490 = scmp.eq.s32.totalorder %s47, 0
      %p491 = por %p489, %p490
      %p492 = scmp.ne.s32.totalorder %s480, %s481
      %p493 = scmp.eq.s32.totalorder %s48, 5
      %p494 = por %p492, %p493
      %p496 = scmp.ne.s32.totalorder %s481, %s495
      %p497 = scmp.eq.s32.totalorder %s48, 0
      %p498 = por %p496, %p497
      %s500 = sadd.s32 %s499, 1
      %p503 = scmp.eq.s32.totalorder %s42, 5
      %p504 = scmp.ne.s32.totalorder %s499, %s501
      %p505 = scmp.eq.s32.totalorder %s42, 0
      %p506 = por %p504, %p505
      %p507 = scmp.ne.s32.totalorder %s499, %s501
      %p508 = scmp.eq.s32.totalorder %s47, 5
      %p509 = por %p507, %p508
      %p510 = scmp.ne.s32.totalorder %s501, %s502
      %p511 = scmp.eq.s32.totalorder %s47, 0
      %p512 = por %p510, %p511
      %p513 = scmp.ne.s32.totalorder %s501, %s502
      %p514 = scmp.eq.s32.totalorder %s48, 5
      %p515 = por %p513, %p514
      %p517 = scmp.ne.s32.totalorder %s502, %s516
      %p518 = scmp.eq.s32.totalorder %s48, 0
      %p519 = por %p517, %p518
      %s521 = sadd.s32 %s520, 1
      %p524 = scmp.eq.s32.totalorder %s42, 5
      %p525 = scmp.ne.s32.totalorder %s520, %s522
      %p526 = scmp.eq.s32.totalorder %s42, 0
      %p527 = por %p525, %p526
      %p528 = scmp.ne.s32.totalorder %s520, %s522
      %p529 = scmp.eq.s32.totalorder %s47, 5
      %p530 = por %p528, %p529
      %p531 = scmp.ne.s32.totalorder %s522, %s523
      %p532 = scmp.eq.s32.totalorder %s47, 0
      %p533 = por %p531, %p532
      %p534 = scmp.ne.s32.totalorder %s522, %s523
      %p535 = scmp.eq.s32.totalorder %s48, 5
      %p536 = por %p534, %p535
      %p538 = scmp.ne.s32.totalorder %s523, %s537
      %p539 = scmp.eq.s32.totalorder %s48, 0
      %p540 = por %p538, %p539
      %s542 = sadd.s32 %s541, 1
      %p545 = scmp.eq.s32.totalorder %s42, 5
      %p546 = scmp.ne.s32.totalorder %s541, %s543
      %p547 = scmp.eq.s32.totalorder %s42, 0
      %p548 = por %p546, %p547
      %p549 = scmp.ne.s32.totalorder %s541, %s543
      %p550 = scmp.eq.s32.totalorder %s47, 5
      %p551 = por %p549, %p550
      %p552 = scmp.ne.s32.totalorder %s543, %s544
      %p553 = scmp.eq.s32.totalorder %s47, 0
      %p554 = por %p552, %p553
      %p555 = scmp.ne.s32.totalorder %s543, %s544
      %p556 = scmp.eq.s32.totalorder %s48, 5
      %p557 = por %p555, %p556
      %p559 = scmp.ne.s32.totalorder %s544, %s558
      %p560 = scmp.eq.s32.totalorder %s48, 0
      %p561 = por %p559, %p560
      %p562 = scmp.le.s32.totalorder 1, %s42
      %p563 = scmp.lt.s32.totalorder %s42, 7
      %p564 = pnand %p562, %p563
      %p565 = pneg %p564
      // Predicated region
      $region9: #{tpu_custom_call.1} parent=5 // pred_check
        _
      $region10: #{tpu_custom_call.1} parent=5 // pred_check_branch
        %567 = sbr.rel (%p564) target = $region12
      $region11: #{tpu_custom_call.1} parent=5 // pred_region
        %s568 = ssub.s32 %s42, 1
        // Predicated region
        $region13: #{tpu_custom_call.1} parent=11 // pred_check
          %p569 = pneg %p63
        $region14: #{tpu_custom_call.1} parent=11 // pred_check_branch
          %571 = sbr.rel (%p569) target = $region16
        $region15: #{tpu_custom_call.1} parent=11 // pred_region
          %s573 = ssub.s32 256, 256
          %574 = vsyncadd [#allocation5], %s573
          %s575 = sshll.u32 [#allocation4], 4
          %s576 = int_to_ptr.vmem [resolvable:$true] %s575
          %581 = dma.hbm_to_vmem [thread:$0]  %s0, 256, %s576, [#allocation5], 128, 128, 8
        $region16: #{tpu_custom_call.1} parent=11 // pred_fallthru
          _
        // Predicated region
        $region17: #{tpu_custom_call.1} parent=11 // pred_check
          %p582 = pneg %p84
        $region18: #{tpu_custom_call.1} parent=11 // pred_check_branch
          %584 = sbr.rel (%p582) target = $region20
        $region19: #{tpu_custom_call.1} parent=11 // pred_region
          _
        $region20: #{tpu_custom_call.1} parent=11 // pred_fallthru
          _
        // Predicated region
        $region21: #{tpu_custom_call.1} parent=11 // pred_check
          %p585 = pneg %p105
        $region22: #{tpu_custom_call.1} parent=11 // pred_check_branch
          %587 = sbr.rel (%p585) target = $region24
        $region23: #{tpu_custom_call.1} parent=11 // pred_region
          _
        $region24: #{tpu_custom_call.1} parent=11 // pred_fallthru
          _
        // Predicated region
        $region25: #{tpu_custom_call.1} parent=11 // pred_check
          %p588 = pneg %p126
        $region26: #{tpu_custom_call.1} parent=11 // pred_check_branch
          %590 = sbr.rel (%p588) target = $region28
        $region27: #{tpu_custom_call.1} parent=11 // pred_region
          %s592 = ssub.s32 256, 256
          %593 = vsyncadd [#allocation8], %s592
          %s594 = sshll.u32 [#allocation7], 4
          %s595 = int_to_ptr.vmem [resolvable:$true] %s594
          %600 = dma.hbm_to_vmem [thread:$0]  %s3, 256, %s595, [#allocation8], 128, 128, 8
        $region28: #{tpu_custom_call.1} parent=11 // pred_fallthru
          _
        // Predicated region
        $region29: #{tpu_custom_call.1} parent=11 // pred_check
          %p601 = pneg %p147
        $region30: #{tpu_custom_call.1} parent=11 // pred_check_branch
          %603 = sbr.rel (%p601) target = $region32
        $region31: #{tpu_custom_call.1} parent=11 // pred_region
          _
        $region32: #{tpu_custom_call.1} parent=11 // pred_fallthru
          _
        // Predicated region
        $region33: #{tpu_custom_call.1} parent=11 // pred_check
          %p604 = pneg %p168
        $region34: #{tpu_custom_call.1} parent=11 // pred_check_branch
          %606 = sbr.rel (%p604) target = $region36
        $region35: #{tpu_custom_call.1} parent=11 // pred_region
          %s608 = ssub.s32 32, 32
          %609 = vsyncadd [#allocation8], %s608
          %s611 = sshll.u32 [#allocation9], 4
          %s612 = int_to_ptr.vmem [resolvable:$true] %s611
          %614 = dma.hbm_to_vmem [thread:$0]  %s5, 32, %s612, [#allocation8]
        $region36: #{tpu_custom_call.1} parent=11 // pred_fallthru
          _
        // Predicated region
        $region37: #{tpu_custom_call.1} parent=11 // pred_check
          %p615 = pneg %p449
        $region38: #{tpu_custom_call.1} parent=11 // pred_check_branch
          %617 = sbr.rel (%p615) target = $region40
        $region39: #{tpu_custom_call.1} parent=11 // pred_region
          _
        $region40: #{tpu_custom_call.1} parent=11 // pred_fallthru
          _
        // Predicated region
        $region41: #{tpu_custom_call.1} parent=11 // pred_check
          %p618 = pneg %p470
        $region42: #{tpu_custom_call.1} parent=11 // pred_check_branch
          %620 = sbr.rel (%p618) target = $region44
        $region43: #{tpu_custom_call.1} parent=11 // pred_region
          _
        $region44: #{tpu_custom_call.1} parent=11 // pred_fallthru
          _
        // Predicated region
        $region45: #{tpu_custom_call.1} parent=11 // pred_check
          %p621 = pneg %p491
        $region46: #{tpu_custom_call.1} parent=11 // pred_check_branch
          %623 = sbr.rel (%p621) target = $region48
        $region47: #{tpu_custom_call.1} parent=11 // pred_region
          _
        $region48: #{tpu_custom_call.1} parent=11 // pred_fallthru
          _
        // Predicated region
        $region49: #{tpu_custom_call.1} parent=11 // pred_check
          %p624 = pneg %p512
        $region50: #{tpu_custom_call.1} parent=11 // pred_check_branch
          %626 = sbr.rel (%p624) target = $region52
        $region51: #{tpu_custom_call.1} parent=11 // pred_region
          _
        $region52: #{tpu_custom_call.1} parent=11 // pred_fallthru
          _
      $region12: #{tpu_custom_call.1} parent=5 // pred_fallthru
        _
      %p627 = scmp.lt.s32.totalorder %s42, 6
      // Predicated region
      $region53: #{tpu_custom_call.1} parent=5 // pred_check
        %p628 = pneg %p627
      $region54: #{tpu_custom_call.1} parent=5 // pred_check_branch
        %630 = sbr.rel (%p628) target = $region56
      $region55: #{tpu_custom_call.1} parent=5 // pred_region
        // Predicated region
        $region57: #{tpu_custom_call.1} parent=55 // pred_check
          %p631 = pneg %p188
        $region58: #{tpu_custom_call.1} parent=55 // pred_check_branch
          %633 = sbr.rel (%p631) target = $region60
        $region59: #{tpu_custom_call.1} parent=55 // pred_region
          %s634 = sand.u32 %s42, 1
          %s635 = scalar_lea.sflag [#allocation11], %s634
          %s636 = sand.u32 %s178, 1
          %s637 = smul.addr %s636, 32
          %s638 = scalar_lea.vmem [#allocation10], %s637
          %s640 = ssub.s32 512, 512
          %641 = vsyncadd %s635, %s640
          %s642 = smul.addr %s42, 8
          %s643 = smul.addr %s642, 64
          %s644 = scalar_lea.hbm %s6, %s643
          %s645 = sshll.u32 %s638, 4
          %s646 = int_to_ptr.vmem [resolvable:$true] %s645
          %651 = dma.hbm_to_vmem [thread:$0]  %s644, 512, %s646, %s635, 64, 64, 4
        $region60: #{tpu_custom_call.1} parent=55 // pred_fallthru
          _
        // Predicated region
        $region61: #{tpu_custom_call.1} parent=55 // pred_check
          %p652 = pneg %p214
        $region62: #{tpu_custom_call.1} parent=55 // pred_check_branch
          %654 = sbr.rel (%p652) target = $region64
        $region63: #{tpu_custom_call.1} parent=55 // pred_region
          %s655 = sand.u32 %s42, 1
          %s656 = scalar_lea.sflag [#allocation11], %s655
          %s657 = sand.u32 %s204, 1
          %s658 = smul.addr %s657, 32
          %s659 = scalar_lea.vmem [#allocation12], %s658
          %s661 = ssub.s32 512, 512
          %662 = vsyncadd %s656, %s661
          %s663 = smul.addr %s42, 8
          %s664 = smul.addr %s663, 64
          %s665 = scalar_lea.hbm %s7, %s664
          %s666 = sshll.u32 %s659, 4
          %s667 = int_to_ptr.vmem [resolvable:$true] %s666
          %672 = dma.hbm_to_vmem [thread:$0]  %s665, 512, %s667, %s656, 64, 64, 4
        $region64: #{tpu_custom_call.1} parent=55 // pred_fallthru
          _
        // Predicated region
        $region65: #{tpu_custom_call.1} parent=55 // pred_check
          %p673 = pneg %p240
        $region66: #{tpu_custom_call.1} parent=55 // pred_check_branch
          %675 = sbr.rel (%p673) target = $region68
        $region67: #{tpu_custom_call.1} parent=55 // pred_region
          %s676 = sand.u32 %s42, 1
          %s677 = scalar_lea.sflag [#allocation14], %s676
          %s678 = sand.u32 %s230, 1
          %s679 = smul.addr %s678, 32
          %s680 = scalar_lea.vmem [#allocation13], %s679
          %s682 = ssub.s32 512, 512
          %683 = vsyncadd %s677, %s682
          %s684 = smul.addr %s42, 8
          %s685 = smul.addr %s684, 64
          %s686 = scalar_lea.hbm %s8, %s685
          %s687 = sshll.u32 %s680, 4
          %s688 = int_to_ptr.vmem [resolvable:$true] %s687
          %693 = dma.hbm_to_vmem [thread:$0]  %s686, 512, %s688, %s677, 64, 64, 4
        $region68: #{tpu_custom_call.1} parent=55 // pred_fallthru
          _
        // Predicated region
        $region69: #{tpu_custom_call.1} parent=55 // pred_check
          %p694 = pneg %p266
        $region70: #{tpu_custom_call.1} parent=55 // pred_check_branch
          %696 = sbr.rel (%p694) target = $region72
        $region71: #{tpu_custom_call.1} parent=55 // pred_region
          %p697 = scmp.lt.s32.totalorder %s42, 5
          %s698 = scalar_select %p697, %s42, 5
          %s699 = scalar_lea.vmem %s9, %s698
        $region72: #{tpu_custom_call.1} parent=55 // pred_fallthru
          _
        // Predicated region
        $region73: #{tpu_custom_call.1} parent=55 // pred_check
          %p700 = pneg %p292
        $region74: #{tpu_custom_call.1} parent=55 // pred_check_branch
          %702 = sbr.rel (%p700) target = $region76
        $region75: #{tpu_custom_call.1} parent=55 // pred_region
          %s703 = sand.u32 %s42, 1
          %s704 = scalar_lea.sflag [#allocation14], %s703
          %s705 = sand.u32 %s282, 1
          %s706 = smul.addr %s705, 32
          %s707 = scalar_lea.vmem [#allocation15], %s706
          %s709 = ssub.s32 512, 512
          %710 = vsyncadd %s704, %s709
          %s711 = smul.addr %s42, 8
          %s712 = smul.addr %s711, 64
          %s713 = scalar_lea.hbm %s10, %s712
          %s714 = sshll.u32 %s707, 4
          %s715 = int_to_ptr.vmem [resolvable:$true] %s714
          %720 = dma.hbm_to_vmem [thread:$0]  %s713, 512, %s715, %s704, 64, 64, 4
        $region76: #{tpu_custom_call.1} parent=55 // pred_fallthru
          _
        // Predicated region
        $region77: #{tpu_custom_call.1} parent=55 // pred_check
          %p721 = pneg %p318
        $region78: #{tpu_custom_call.1} parent=55 // pred_check_branch
          %723 = sbr.rel (%p721) target = $region80
        $region79: #{tpu_custom_call.1} parent=55 // pred_region
          %s724 = sand.u32 %s42, 1
          %s725 = scalar_lea.sflag [#allocation17], %s724
          %s726 = sand.u32 %s308, 1
          %s727 = smul.addr %s726, 32
          %s728 = scalar_lea.vmem [#allocation16], %s727
          %s730 = ssub.s32 512, 512
          %731 = vsyncadd %s725, %s730
          %s732 = smul.addr %s42, 8
          %s733 = smul.addr %s732, 64
          %s734 = scalar_lea.hbm %s11, %s733
          %s735 = sshll.u32 %s728, 4
          %s736 = int_to_ptr.vmem [resolvable:$true] %s735
          %741 = dma.hbm_to_vmem [thread:$0]  %s734, 512, %s736, %s725, 64, 64, 4
        $region80: #{tpu_custom_call.1} parent=55 // pred_fallthru
          _
        // Predicated region
        $region81: #{tpu_custom_call.1} parent=55 // pred_check
          %p742 = pneg %p344
        $region82: #{tpu_custom_call.1} parent=55 // pred_check_branch
          %744 = sbr.rel (%p742) target = $region84
        $region83: #{tpu_custom_call.1} parent=55 // pred_region
          %s745 = sand.u32 %s42, 1
          %s746 = scalar_lea.sflag [#allocation17], %s745
          %s747 = sand.u32 %s334, 1
          %s748 = smul.addr %s747, 32
          %s749 = scalar_lea.vmem [#allocation18], %s748
          %s751 = ssub.s32 512, 512
          %752 = vsyncadd %s746, %s751
          %s753 = smul.addr %s42, 8
          %s754 = smul.addr %s753, 64
          %s755 = scalar_lea.hbm %s12, %s754
          %s756 = sshll.u32 %s749, 4
          %s757 = int_to_ptr.vmem [resolvable:$true] %s756
          %762 = dma.hbm_to_vmem [thread:$0]  %s755, 512, %s757, %s746, 64, 64, 4
        $region84: #{tpu_custom_call.1} parent=55 // pred_fallthru
          _
        // Predicated region
        $region85: #{tpu_custom_call.1} parent=55 // pred_check
          %p763 = pneg %p370
        $region86: #{tpu_custom_call.1} parent=55 // pred_check_branch
          %765 = sbr.rel (%p763) target = $region88
        $region87: #{tpu_custom_call.1} parent=55 // pred_region
          %p766 = scmp.lt.s32.totalorder %s42, 5
          %s767 = scalar_select %p766, %s42, 5
          %s768 = scalar_lea.vmem %s13, %s767
        $region88: #{tpu_custom_call.1} parent=55 // pred_fallthru
          _
        // Predicated region
        $region89: #{tpu_custom_call.1} parent=55 // pred_check
          %p769 = pneg %p396
        $region90: #{tpu_custom_call.1} parent=55 // pred_check_branch
          %771 = sbr.rel (%p769) target = $region92
        $region91: #{tpu_custom_call.1} parent=55 // pred_region
          %p772 = scmp.lt.s32.totalorder %s42, 5
          %s773 = scalar_select %p772, %s42, 5
          %s774 = scalar_lea.vmem %s14, %s773
        $region92: #{tpu_custom_call.1} parent=55 // pred_fallthru
          _
        // Predicated region
        $region93: #{tpu_custom_call.1} parent=55 // pred_check
          %p775 = pneg %p422
        $region94: #{tpu_custom_call.1} parent=55 // pred_check_branch
          %777 = sbr.rel (%p775) target = $region96
        $region95: #{tpu_custom_call.1} parent=55 // pred_region
          %p778 = scmp.lt.s32.totalorder %s42, 5
          %s779 = scalar_select %p778, %s42, 5
          %s780 = scalar_lea.vmem %s15, %s779
        $region96: #{tpu_custom_call.1} parent=55 // pred_fallthru
          _
      $region56: #{tpu_custom_call.1} parent=5 // pred_fallthru
        _
      %p781 = scmp.le.s32.totalorder 1, %s42
      %p782 = scmp.lt.s32.totalorder %s42, 7
      %p783 = pnand %p781, %p782
      %p784 = pneg %p783
      // Predicated region
      $region97: #{tpu_custom_call.1} parent=5 // pred_check
        _
      $region98: #{tpu_custom_call.1} parent=5 // pred_check_branch
        %786 = sbr.rel (%p783) target = $region100
      $region99: #{tpu_custom_call.1} parent=5 // pred_region
        %s787 = ssub.s32 %s42, 1
        // Predicated region
        $region101: #{tpu_custom_call.1} parent=99 // pred_check
          %p788 = pneg %p63
        $region102: #{tpu_custom_call.1} parent=99 // pred_check_branch
          %790 = sbr.rel (%p788) target = $region104
        $region103: #{tpu_custom_call.1} parent=99 // pred_region
          %791 = dma.done [#allocation5], 256
        $region104: #{tpu_custom_call.1} parent=99 // pred_fallthru
          _
        // Predicated region
        $region105: #{tpu_custom_call.1} parent=99 // pred_check
          %p792 = pneg %p126
        $region106: #{tpu_custom_call.1} parent=99 // pred_check_branch
          %794 = sbr.rel (%p792) target = $region108
        $region107: #{tpu_custom_call.1} parent=99 // pred_region
          %795 = dma.done [#allocation8], 256
        $region108: #{tpu_custom_call.1} parent=99 // pred_fallthru
          _
        // Predicated region
        $region109: #{tpu_custom_call.1} parent=99 // pred_check
          %p796 = pneg %p168
        $region110: #{tpu_custom_call.1} parent=99 // pred_check_branch
          %798 = sbr.rel (%p796) target = $region112
        $region111: #{tpu_custom_call.1} parent=99 // pred_region
          %799 = dma.done [#allocation8], 32
        $region112: #{tpu_custom_call.1} parent=99 // pred_fallthru
          _
        %s800 = sand.u32 %s47, 1
        %s801 = scalar_lea.sflag [#allocation11], %s800
        %s802 = sand.u32 %s181, 1
        %s803 = smul.addr %s802, 32
        %s804 = scalar_lea.vmem [#allocation10], %s803
        // Predicated region
        $region113: #{tpu_custom_call.1} parent=99 // pred_check
          %p805 = pneg %p194
        $region114: #{tpu_custom_call.1} parent=99 // pred_check_branch
          %807 = sbr.rel (%p805) target = $region116
        $region115: #{tpu_custom_call.1} parent=99 // pred_region
          %808 = dma.done %s801, 512
        $region116: #{tpu_custom_call.1} parent=99 // pred_fallthru
          _
        %s809 = sand.u32 %s47, 1
        %s810 = scalar_lea.sflag [#allocation11], %s809
        %s811 = sand.u32 %s207, 1
        %s812 = smul.addr %s811, 32
        %s813 = scalar_lea.vmem [#allocation12], %s812
        // Predicated region
        $region117: #{tpu_custom_call.1} parent=99 // pred_check
          %p814 = pneg %p220
        $region118: #{tpu_custom_call.1} parent=99 // pred_check_branch
          %816 = sbr.rel (%p814) target = $region120
        $region119: #{tpu_custom_call.1} parent=99 // pred_region
          %817 = dma.done %s810, 512
        $region120: #{tpu_custom_call.1} parent=99 // pred_fallthru
          _
        %s818 = sand.u32 %s47, 1
        %s819 = scalar_lea.sflag [#allocation14], %s818
        %s820 = sand.u32 %s233, 1
        %s821 = smul.addr %s820, 32
        %s822 = scalar_lea.vmem [#allocation13], %s821
        // Predicated region
        $region121: #{tpu_custom_call.1} parent=99 // pred_check
          %p823 = pneg %p246
        $region122: #{tpu_custom_call.1} parent=99 // pred_check_branch
          %825 = sbr.rel (%p823) target = $region124
        $region123: #{tpu_custom_call.1} parent=99 // pred_region
          %826 = dma.done %s819, 512
        $region124: #{tpu_custom_call.1} parent=99 // pred_fallthru
          _
        %s827 = sand.u32 %s47, 1
        %s828 = scalar_lea.sflag [#allocation14], %s827
        %s829 = sand.u32 %s285, 1
        %s830 = smul.addr %s829, 32
        %s831 = scalar_lea.vmem [#allocation15], %s830
        // Predicated region
        $region125: #{tpu_custom_call.1} parent=99 // pred_check
          %p832 = pneg %p298
        $region126: #{tpu_custom_call.1} parent=99 // pred_check_branch
          %834 = sbr.rel (%p832) target = $region128
        $region127: #{tpu_custom_call.1} parent=99 // pred_region
          %835 = dma.done %s828, 512
        $region128: #{tpu_custom_call.1} parent=99 // pred_fallthru
          _
        %s836 = sand.u32 %s47, 1
        %s837 = scalar_lea.sflag [#allocation17], %s836
        %s838 = sand.u32 %s311, 1
        %s839 = smul.addr %s838, 32
        %s840 = scalar_lea.vmem [#allocation16], %s839
        // Predicated region
        $region129: #{tpu_custom_call.1} parent=99 // pred_check
          %p841 = pneg %p324
        $region130: #{tpu_custom_call.1} parent=99 // pred_check_branch
          %843 = sbr.rel (%p841) target = $region132
        $region131: #{tpu_custom_call.1} parent=99 // pred_region
          %844 = dma.done %s837, 512
        $region132: #{tpu_custom_call.1} parent=99 // pred_fallthru
          _
        %s845 = sand.u32 %s47, 1
        %s846 = scalar_lea.sflag [#allocation17], %s845
        %s847 = sand.u32 %s337, 1
        %s848 = smul.addr %s847, 32
        %s849 = scalar_lea.vmem [#allocation18], %s848
        // Predicated region
        $region133: #{tpu_custom_call.1} parent=99 // pred_check
          %p850 = pneg %p350
        $region134: #{tpu_custom_call.1} parent=99 // pred_check_branch
          %852 = sbr.rel (%p850) target = $region136
        $region135: #{tpu_custom_call.1} parent=99 // pred_region
          %853 = dma.done %s846, 512
        $region136: #{tpu_custom_call.1} parent=99 // pred_fallthru
          _
        %p854 = pneg %p63
        %p855 = pneg %p60
        %p856 = pneg %p84
        %p857 = pneg %p81
        %p858 = pneg %p105
        %p859 = pneg %p102
        %p860 = pneg %p126
        %p861 = pneg %p123
        %p862 = pneg %p147
        %p863 = pneg %p144
        %p864 = pneg %p168
        %p865 = pneg %p165
        %s866 = sand.u32 %s47, 1
        %s867 = scalar_lea.sflag [#allocation11], %s866
        %s868 = sand.u32 %s181, 1
        %s869 = smul.addr %s868, 32
        %s870 = scalar_lea.vmem [#allocation10], %s869
        %p871 = pneg %p194
        %p872 = pneg %p191
        %s873 = sand.u32 %s47, 1
        %s874 = scalar_lea.sflag [#allocation11], %s873
        %s875 = sand.u32 %s207, 1
        %s876 = smul.addr %s875, 32
        %s877 = scalar_lea.vmem [#allocation12], %s876
        %p878 = pneg %p220
        %p879 = pneg %p217
        %s880 = sand.u32 %s47, 1
        %s881 = scalar_lea.sflag [#allocation14], %s880
        %s882 = sand.u32 %s233, 1
        %s883 = smul.addr %s882, 32
        %s884 = scalar_lea.vmem [#allocation13], %s883
        %p885 = pneg %p246
        %p886 = pneg %p243
        %p887 = scmp.lt.s32.totalorder %s47, 5
        %s888 = scalar_select %p887, %s47, 5
        %s889 = scalar_lea.vmem %s9, %s888
        %p890 = pneg %p272
        %p891 = pneg %p269
        %s892 = sand.u32 %s47, 1
        %s893 = scalar_lea.sflag [#allocation14], %s892
        %s894 = sand.u32 %s285, 1
        %s895 = smul.addr %s894, 32
        %s896 = scalar_lea.vmem [#allocation15], %s895
        %p897 = pneg %p298
        %p898 = pneg %p295
        %s899 = sand.u32 %s47, 1
        %s900 = scalar_lea.sflag [#allocation17], %s899
        %s901 = sand.u32 %s311, 1
        %s902 = smul.addr %s901, 32
        %s903 = scalar_lea.vmem [#allocation16], %s902
        %p904 = pneg %p324
        %p905 = pneg %p321
        %s906 = sand.u32 %s47, 1
        %s907 = scalar_lea.sflag [#allocation17], %s906
        %s908 = sand.u32 %s337, 1
        %s909 = smul.addr %s908, 32
        %s910 = scalar_lea.vmem [#allocation18], %s909
        %p911 = pneg %p350
        %p912 = pneg %p347
        %p913 = scmp.lt.s32.totalorder %s47, 5
        %s914 = scalar_select %p913, %s47, 5
        %s915 = scalar_lea.vmem %s13, %s914
        %p916 = pneg %p376
        %p917 = pneg %p373
        %p918 = scmp.lt.s32.totalorder %s47, 5
        %s919 = scalar_select %p918, %s47, 5
        %s920 = scalar_lea.vmem %s14, %s919
        %p921 = pneg %p402
        %p922 = pneg %p399
        %p923 = scmp.lt.s32.totalorder %s47, 5
        %s924 = scalar_select %p923, %s47, 5
        %s925 = scalar_lea.vmem %s15, %s924
        %p926 = pneg %p428
        %p927 = pneg %p425
        %p928 = pneg %p449
        %p929 = pneg %p446
        %p930 = pneg %p470
        %p931 = pneg %p467
        %p932 = pneg %p491
        %p933 = pneg %p488
        %p934 = pneg %p512
        %p935 = pneg %p509
        %p936 = pneg %p533
        %p937 = pneg %p530
        %p938 = pneg %p554
        %p939 = pneg %p551
        %p940 = scmp.lt.s32.totalorder %s47, 5
        %s941 = scalar_select %p940, %s47, 5
        %s942 = scalar_lea.vmem %s9, %s941
        %p943 = scmp.lt.s32.totalorder %s47, 5
        %s944 = scalar_select %p943, %s47, 5
        %s945 = scalar_lea.vmem %s13, %s944
        %p946 = scmp.lt.s32.totalorder %s47, 5
        %s947 = scalar_select %p946, %s47, 5
        %s948 = scalar_lea.vmem %s14, %s947
        %p949 = scmp.lt.s32.totalorder %s47, 5
        %s950 = scalar_select %p949, %s47, 5
        %s951 = scalar_lea.vmem %s15, %s950
        %p953 = scmp.eq.s32.totalorder %s47, 0
        // Predicated region
        $region137: #{tpu_custom_call.1} parent=99 // pred_check
          %p954 = pneg %p953
        $region138: #{tpu_custom_call.1} parent=99 // pred_check_branch
          %956 = sbr.rel (%p954) target = $region140
        $region139: #{tpu_custom_call.1} parent=99 // pred_region
          %v957 = vld [vmem:[#allocation4] sm:$0xff]
          %v958 = vld [vmem:[#allocation4 + $0x8] sm:$0xff]
          %vm959 = vcmask 523264
          %960 = vst.msk [vmem:[#allocation2] sm:$0xff] %vm959, %v957
          %961 = vst.msk [vmem:[#allocation2 + $0x8] sm:$0xff] %vm959, %v958
        $region140: #{tpu_custom_call.1} parent=99 // pred_fallthru
          _
        %v962 = vld [vmem:[#allocation2] sm:$0xff]
        %v963 = vld [vmem:[#allocation2 + $0x8] sm:$0xff]
        %v964 = vld [vmem:[%s2] sm:$0xff]
        %v965 = vld [vmem:[%s2 + $0x8] sm:$0xff]
        %v966 = vld [vmem:[%s2 + $0x10] sm:$0xff]
        %v967 = vld [vmem:[%s2 + $0x18] sm:$0xff]
        %v968 = vld [vmem:[%s2 + $0x20] sm:$0xff]
        %v969 = vld [vmem:[%s2 + $0x28] sm:$0xff]
        %vm970 = vcmask 130048
        %v972 = vsel %vm970, %v964, 0
        %v975 = vsel %vm970, %v965, 0
        %v978 = vsel %vm970, %v966, 0
        %v981 = vsel %vm970, %v967, 0
        %v984 = vsel %vm970, %v968, 0
        %v987 = vsel %vm970, %v969, 0
        %989 = vmatprep.subr.mxu0 0.0
        %990 = vmatpush1.msra.mxu0 0.0
        %991 = vmatprep.subr.mxu0 0.0
        %992 = vmatpush1.msra.mxu0 0.0
        %993 = vmatprep.subr.mxu0 0.0
        %994 = vmatpush1.msra.mxu0 0.0
        %995 = vmatprep.subr.mxu0 0.0
        %996 = vmatpush1.msra.mxu0 0.0
        %997 = vmatprep.subr.mxu0 0.0
        %998 = vmatpush1.msra.mxu0 0.0
        %999 = vmatprep.subr.mxu0 0.0
        %1000 = vmatpush1.msra.mxu0 0.0
        %1001 = vmatprep.subr.mxu0 0.0
        %1002 = vmatpush1.msra.mxu0 0.0
        %1003 = vmatprep.subr.mxu0 0.0
        %1004 = vmatpush1.msra.mxu0 0.0
        %1005 = vmatprep.subr.mxu0 0.0
        %1006 = vmatpush1.msra.mxu0 0.0
        %1007 = vmatprep.subr.mxu0 0.0
        %1008 = vmatpush1.msra.mxu0 0.0
        %1009 = vmatprep.subr.mxu0 0.0
        %1010 = vmatpush1.msra.mxu0 0.0
        %1011 = vmatprep.subr.mxu0 0.0
        %1012 = vmatpush1.msra.mxu0 0.0
        %1013 = vmatprep.subr.mxu0 0.0
        %1014 = vmatpush1.msra.mxu0 0.0
        %1015 = vmatprep.subr.mxu0 0.0
        %1016 = vmatpush1.msra.mxu0 0.0
        %1017 = vmatprep.subr.mxu0 0.0
        %1018 = vmatpush1.msra.mxu0 %v963
        %1019 = vmatprep.subr.mxu0 0.0
        %1020 = vmatpush1.msra.mxu0 %v962
        %1021 = vmatprep.subr.mxu0 0.0
        %1022 = vmatpush2.msra.mxu0 0.0
        %1023 = vmatprep.subr.mxu0 0.0
        %1024 = vmatpush2.msra.mxu0 0.0
        %1025 = vmatprep.subr.mxu0 0.0
        %1026 = vmatpush2.msra.mxu0 0.0
        %1027 = vmatprep.subr.mxu0 0.0
        %1028 = vmatpush2.msra.mxu0 0.0
        %1029 = vmatprep.subr.mxu0 0.0
        %1030 = vmatpush2.msra.mxu0 0.0
        %1031 = vmatprep.subr.mxu0 0.0
        %1032 = vmatpush2.msra.mxu0 0.0
        %1033 = vmatprep.subr.mxu0 0.0
        %1034 = vmatpush2.msra.mxu0 0.0
        %1035 = vmatprep.subr.mxu0 0.0
        %1036 = vmatpush2.msra.mxu0 0.0
        %1037 = vmatprep.subr.mxu0 0.0
        %1038 = vmatpush2.msra.mxu0 0.0
        %1039 = vmatprep.subr.mxu0 0.0
        %1040 = vmatpush2.msra.mxu0 0.0
        %1041 = vmatprep.subr.mxu0 0.0
        %1042 = vmatpush2.msra.mxu0 0.0
        %1043 = vmatprep.subr.mxu0 0.0
        %1044 = vmatpush2.msra.mxu0 0.0
        %1045 = vmatprep.subr.mxu0 0.0
        %1046 = vmatpush2.msra.mxu0 0.0
        %1047 = vmatprep.subr.mxu0 0.0
        %1048 = vmatpush2.msra.mxu0 0.0
        %1049 = vmatprep.subr.mxu0 0.0
        %1050 = vmatpush2.msra.mxu0 0.0
        %1051 = vmatprep.subr.mxu0 0.0
        %1052 = vmatpush2.msra.mxu0 0.0
        %1053 = vmatprep.mubr.f32.mxu0 0.0
        %1054 = vmatmul.mubr.f32.gmra.mxu0 %v972
        %v1055 = vpop.f32.mrf.mxu0
        %v1056 = vadd.f32 0.0, %v1055
        %v1057 = vpop.f32.mrf.mxu0
        %1058 = vmatprep.mubr.f32.mxu0 0.0
        %1059 = vmatmul.mubr.f32.gmra.mxu0 %v975
        %v1060 = vpop.f32.mrf.mxu0
        %v1061 = vadd.f32 0.0, %v1060
        %v1062 = vpop.f32.mrf.mxu0
        %1063 = vmatprep.mubr.f32.mxu0 0.0
        %1064 = vmatmul.mubr.f32.gmra.mxu0 %v978
        %v1065 = vpop.f32.mrf.mxu0
        %v1066 = vadd.f32 0.0, %v1065
        %v1067 = vpop.f32.mrf.mxu0
        %1068 = vmatprep.mubr.f32.mxu0 0.0
        %1069 = vmatmul.mubr.f32.gmra.mxu0 %v981
        %v1070 = vpop.f32.mrf.mxu0
        %v1071 = vadd.f32 0.0, %v1070
        %v1072 = vpop.f32.mrf.mxu0
        %1073 = vmatprep.mubr.f32.mxu0 0.0
        %1074 = vmatmul.mubr.f32.gmra.mxu0 %v984
        %v1075 = vpop.f32.mrf.mxu0
        %v1076 = vadd.f32 0.0, %v1075
        %v1077 = vpop.f32.mrf.mxu0
        %1078 = vmatprep.mubr.f32.mxu0 0.0
        %1079 = vmatmul.mubr.f32.gmra.mxu0 %v987
        %v1080 = vpop.f32.mrf.mxu0
        %v1081 = vadd.f32 0.0, %v1080
        %v1082 = vpop.f32.mrf.mxu0
        %1083 = vdwg.mxu0
        %v1084 = vld [vmem:[%s1] sm:$0xff]
        %v1085 = vld [vmem:[%s1 + $0x8] sm:$0xff]
        %v1086 = vld [vmem:[%s1 + $0x10] sm:$0xff]
        %v1087 = vld [vmem:[%s1 + $0x18] sm:$0xff]
        %v1088 = vld [vmem:[%s1 + $0x20] sm:$0xff]
        %v1089 = vld [vmem:[%s1 + $0x28] sm:$0xff]
        %v1091 = vsel %vm970, %v1084, 0
        %v1094 = vsel %vm970, %v1085, 0
        %v1097 = vsel %vm970, %v1086, 0
        %v1100 = vsel %vm970, %v1087, 0
        %v1103 = vsel %vm970, %v1088, 0
        %v1106 = vsel %vm970, %v1089, 0
        %1108 = vmatprep.subr.mxu0 0.0
        %1109 = vmatpush1.msra.mxu0 0.0
        %1110 = vmatprep.subr.mxu0 0.0
        %1111 = vmatpush1.msra.mxu0 0.0
        %1112 = vmatprep.subr.mxu0 0.0
        %1113 = vmatpush1.msra.mxu0 0.0
        %1114 = vmatprep.subr.mxu0 0.0
        %1115 = vmatpush1.msra.mxu0 0.0
        %1116 = vmatprep.subr.mxu0 0.0
        %1117 = vmatpush1.msra.mxu0 0.0
        %1118 = vmatprep.subr.mxu0 0.0
        %1119 = vmatpush1.msra.mxu0 0.0
        %1120 = vmatprep.subr.mxu0 0.0
        %1121 = vmatpush1.msra.mxu0 0.0
        %1122 = vmatprep.subr.mxu0 0.0
        %1123 = vmatpush1.msra.mxu0 0.0
        %1124 = vmatprep.subr.mxu0 0.0
        %1125 = vmatpush1.msra.mxu0 0.0
        %1126 = vmatprep.subr.mxu0 0.0
        %1127 = vmatpush1.msra.mxu0 0.0
        %1128 = vmatprep.subr.mxu0 0.0
        %1129 = vmatpush1.msra.mxu0 0.0
        %1130 = vmatprep.subr.mxu0 0.0
        %1131 = vmatpush1.msra.mxu0 0.0
        %1132 = vmatprep.subr.mxu0 0.0
        %1133 = vmatpush1.msra.mxu0 0.0
        %1134 = vmatprep.subr.mxu0 0.0
        %1135 = vmatpush1.msra.mxu0 0.0
        %1136 = vmatprep.subr.mxu0 0.0
        %1137 = vmatpush1.msra.mxu0 %v963
        %1138 = vmatprep.subr.mxu0 0.0
        %1139 = vmatpush1.msra.mxu0 %v962
        %1140 = vmatprep.subr.mxu0 0.0
        %1141 = vmatpush2.msra.mxu0 0.0
        %1142 = vmatprep.subr.mxu0 0.0
        %1143 = vmatpush2.msra.mxu0 0.0
        %1144 = vmatprep.subr.mxu0 0.0
        %1145 = vmatpush2.msra.mxu0 0.0
        %1146 = vmatprep.subr.mxu0 0.0
        %1147 = vmatpush2.msra.mxu0 0.0
        %1148 = vmatprep.subr.mxu0 0.0
        %1149 = vmatpush2.msra.mxu0 0.0
        %1150 = vmatprep.subr.mxu0 0.0
        %1151 = vmatpush2.msra.mxu0 0.0
        %1152 = vmatprep.subr.mxu0 0.0
        %1153 = vmatpush2.msra.mxu0 0.0
        %1154 = vmatprep.subr.mxu0 0.0
        %1155 = vmatpush2.msra.mxu0 0.0
        %1156 = vmatprep.subr.mxu0 0.0
        %1157 = vmatpush2.msra.mxu0 0.0
        %1158 = vmatprep.subr.mxu0 0.0
        %1159 = vmatpush2.msra.mxu0 0.0
        %1160 = vmatprep.subr.mxu0 0.0
        %1161 = vmatpush2.msra.mxu0 0.0
        %1162 = vmatprep.subr.mxu0 0.0
        %1163 = vmatpush2.msra.mxu0 0.0
        %1164 = vmatprep.subr.mxu0 0.0
        %1165 = vmatpush2.msra.mxu0 0.0
        %1166 = vmatprep.subr.mxu0 0.0
        %1167 = vmatpush2.msra.mxu0 0.0
        %1168 = vmatprep.subr.mxu0 0.0
        %1169 = vmatpush2.msra.mxu0 0.0
        %1170 = vmatprep.subr.mxu0 0.0
        %1171 = vmatpush2.msra.mxu0 0.0
        %1172 = vmatprep.mubr.f32.mxu0 0.0
        %1173 = vmatmul.mubr.f32.gmra.mxu0 %v1091
        %v1174 = vpop.f32.mrf.mxu0
        %v1175 = vadd.f32 0.0, %v1174
        %v1176 = vpop.f32.mrf.mxu0
        %1177 = vmatprep.mubr.f32.mxu0 0.0
        %1178 = vmatmul.mubr.f32.gmra.mxu0 %v1094
        %v1179 = vpop.f32.mrf.mxu0
        %v1180 = vadd.f32 0.0, %v1179
        %v1181 = vpop.f32.mrf.mxu0
        %1182 = vmatprep.mubr.f32.mxu0 0.0
        %1183 = vmatmul.mubr.f32.gmra.mxu0 %v1097
        %v1184 = vpop.f32.mrf.mxu0
        %v1185 = vadd.f32 0.0, %v1184
        %v1186 = vpop.f32.mrf.mxu0
        %1187 = vmatprep.mubr.f32.mxu0 0.0
        %1188 = vmatmul.mubr.f32.gmra.mxu0 %v1100
        %v1189 = vpop.f32.mrf.mxu0
        %v1190 = vadd.f32 0.0, %v1189
        %v1191 = vpop.f32.mrf.mxu0
        %1192 = vmatprep.mubr.f32.mxu0 0.0
        %1193 = vmatmul.mubr.f32.gmra.mxu0 %v1103
        %v1194 = vpop.f32.mrf.mxu0
        %v1195 = vadd.f32 0.0, %v1194
        %v1196 = vpop.f32.mrf.mxu0
        %1197 = vmatprep.mubr.f32.mxu0 0.0
        %1198 = vmatmul.mubr.f32.gmra.mxu0 %v1106
        %v1199 = vpop.f32.mrf.mxu0
        %v1200 = vadd.f32 0.0, %v1199
        %v1201 = vpop.f32.mrf.mxu0
        %1202 = vdwg.mxu0
        %v1203 = vpack.c.bf16 %v1061, %v1056
        %v1204 = vpack.c.bf16 %v1071, %v1066
        %v1205 = vpack.c.bf16 %v1081, %v1076
        %v1206 = vpack.c.bf16 %v1180, %v1175
        %v1207 = vpack.c.bf16 %v1190, %v1185
        %v1208 = vpack.c.bf16 %v1200, %v1195
        %v1209 = vld [vmem:[%s4] sm:$0xff]
        %v1210 = vld [vmem:[%s4 + $0x8] sm:$0xff]
        %v1211 = vld [vmem:[%s4 + $0x10] sm:$0xff]
        %v1212 = vld [vmem:[%s4 + $0x18] sm:$0xff]
        %v1213 = vld [vmem:[%s4 + $0x20] sm:$0xff]
        %v1214 = vld [vmem:[%s4 + $0x28] sm:$0xff]
        %v1215 = vpack.c.bf16 %v1210, %v1209
        %v1216 = vpack.c.bf16 %v1212, %v1211
        %v1217 = vpack.c.bf16 %v1214, %v1213
        %v1218 = vld [vmem:[%s804] sm:$0xf]
        %v1219 = vld [vmem:[%s804 + $0x4] sm:$0xf]
        %v1220 = vld [vmem:[%s804 + $0x8] sm:$0xf]
        %v1221 = vld [vmem:[%s804 + $0xc] sm:$0xf]
        %v1222 = vld [vmem:[%s804 + $0x10] sm:$0xf]
        %v1223 = vld [vmem:[%s804 + $0x14] sm:$0xf]
        %v1224 = vld [vmem:[%s804 + $0x18] sm:$0xf]
        %v1225 = vld [vmem:[%s804 + $0x1c] sm:$0xf]
        %v1226 = vld [vmem:[%s813] sm:$0xf]
        %v1227 = vld [vmem:[%s813 + $0x4] sm:$0xf]
        %v1228 = vld [vmem:[%s813 + $0x8] sm:$0xf]
        %v1229 = vld [vmem:[%s813 + $0xc] sm:$0xf]
        %v1230 = vld [vmem:[%s813 + $0x10] sm:$0xf]
        %v1231 = vld [vmem:[%s813 + $0x14] sm:$0xf]
        %v1232 = vld [vmem:[%s813 + $0x18] sm:$0xf]
        %v1233 = vld [vmem:[%s813 + $0x1c] sm:$0xf]
        %v1242 = vunpack.c.l.b16 %v1226
        %v1243 = vunpack.c.l.b16 %v1227
        %v1244 = vunpack.c.l.b16 %v1228
        %v1245 = vunpack.c.l.b16 %v1229
        %v1246 = vunpack.c.l.b16 %v1230
        %v1247 = vunpack.c.l.b16 %v1231
        %v1248 = vunpack.c.l.b16 %v1232
        %v1249 = vunpack.c.l.b16 %v1233
        %v1250 = vpack.c.b16 %v1243, %v1242
        %v1251 = vpack.c.b16 %v1245, %v1244
        %v1252 = vpack.c.b16 %v1247, %v1246
        %v1253 = vpack.c.b16 %v1249, %v1248
        %vm1258 = vcmask 523264
        %v1260 = vsel %vm1258, %v1206, 0
        %v1263 = vsel %vm1258, %v1207, 0
        %v1266 = vsel %vm1258, %v1208, 0
        %1268 = vmatprep.subr.bf16.mxu0 0
        %1269 = vmatpush1.bf16.msra.mxu0 0
        %1270 = vmatprep.subr.bf16.mxu0 0
        %1271 = vmatpush1.bf16.msra.mxu0 0
        %1272 = vmatprep.subr.bf16.mxu0 0
        %1273 = vmatpush1.bf16.msra.mxu0 0
        %1274 = vmatprep.subr.bf16.mxu0 0
        %1275 = vmatpush1.bf16.msra.mxu0 0
        %1276 = vmatprep.subr.bf16.mxu0 0
        %1277 = vmatpush1.bf16.msra.mxu0 %v1253
        %1278 = vmatprep.subr.bf16.mxu0 0
        %1279 = vmatpush1.bf16.msra.mxu0 %v1252
        %1280 = vmatprep.subr.bf16.mxu0 0
        %1281 = vmatpush1.bf16.msra.mxu0 %v1251
        %1282 = vmatprep.subr.bf16.mxu0 0
        %1283 = vmatpush1.bf16.msra.mxu0 %v1250
        %1284 = vmatprep.subr.bf16.mxu0 0
        %1285 = vmatpush2.bf16.msra.mxu0 0
        %1286 = vmatprep.subr.bf16.mxu0 0
        %1287 = vmatpush2.bf16.msra.mxu0 0
        %1288 = vmatprep.subr.bf16.mxu0 0
        %1289 = vmatpush2.bf16.msra.mxu0 0
        %1290 = vmatprep.subr.bf16.mxu0 0
        %1291 = vmatpush2.bf16.msra.mxu0 0
        %1292 = vmatprep.subr.bf16.mxu0 0
        %1293 = vmatpush2.bf16.msra.mxu0 0
        %1294 = vmatprep.subr.bf16.mxu0 0
        %1295 = vmatpush2.bf16.msra.mxu0 0
        %1296 = vmatprep.subr.bf16.mxu0 0
        %1297 = vmatpush2.bf16.msra.mxu0 0
        %1298 = vmatprep.subr.bf16.mxu0 0
        %1299 = vmatpush2.bf16.msra.mxu0 0
        %1300 = vmatprep.mubr.bf16.mxu0 0
        %1301 = vmatmul.mubr.bf16.gmra.mxu0 %v1260
        %v1302 = vpop.f32.mrf.mxu0
        %v1303 = vadd.f32 0.0, %v1302
        %v1304 = vpop.f32.mrf.mxu0
        %v1305 = vpop.f32.mrf.mxu0
        %v1306 = vadd.f32 0.0, %v1305
        %v1307 = vpop.f32.mrf.mxu0
        %1308 = vmatprep.mubr.bf16.mxu0 0
        %1309 = vmatmul.mubr.bf16.gmra.mxu0 %v1263
        %v1310 = vpop.f32.mrf.mxu0
        %v1311 = vadd.f32 0.0, %v1310
        %v1312 = vpop.f32.mrf.mxu0
        %v1313 = vpop.f32.mrf.mxu0
        %v1314 = vadd.f32 0.0, %v1313
        %v1315 = vpop.f32.mrf.mxu0
        %1316 = vmatprep.mubr.bf16.mxu0 0
        %1317 = vmatmul.mubr.bf16.gmra.mxu0 %v1266
        %v1318 = vpop.f32.mrf.mxu0
        %v1319 = vadd.f32 0.0, %v1318
        %v1320 = vpop.f32.mrf.mxu0
        %v1321 = vpop.f32.mrf.mxu0
        %v1322 = vadd.f32 0.0, %v1321
        %v1323 = vpop.f32.mrf.mxu0
        %1324 = vdwg.mxu0
        %v1333 = vunpack.c.l.b16 %v1218
        %v1334 = vunpack.c.l.b16 %v1219
        %v1335 = vunpack.c.l.b16 %v1220
        %v1336 = vunpack.c.l.b16 %v1221
        %v1337 = vunpack.c.l.b16 %v1222
        %v1338 = vunpack.c.l.b16 %v1223
        %v1339 = vunpack.c.l.b16 %v1224
        %v1340 = vunpack.c.l.b16 %v1225
        %v1341 = vpack.c.b16 %v1334, %v1333
        %v1342 = vpack.c.b16 %v1336, %v1335
        %v1343 = vpack.c.b16 %v1338, %v1337
        %v1344 = vpack.c.b16 %v1340, %v1339
        %v1350 = vsel %vm1258, %v1203, 0
        %v1353 = vsel %vm1258, %v1204, 0
        %v1356 = vsel %vm1258, %v1205, 0
        %1358 = vmatprep.subr.bf16.mxu0 0
        %1359 = vmatpush1.bf16.msra.mxu0 0
        %1360 = vmatprep.subr.bf16.mxu0 0
        %1361 = vmatpush1.bf16.msra.mxu0 0
        %1362 = vmatprep.subr.bf16.mxu0 0
        %1363 = vmatpush1.bf16.msra.mxu0 0
        %1364 = vmatprep.subr.bf16.mxu0 0
        %1365 = vmatpush1.bf16.msra.mxu0 0
        %1366 = vmatprep.subr.bf16.mxu0 0
        %1367 = vmatpush1.bf16.msra.mxu0 %v1344
        %1368 = vmatprep.subr.bf16.mxu0 0
        %1369 = vmatpush1.bf16.msra.mxu0 %v1343
        %1370 = vmatprep.subr.bf16.mxu0 0
        %1371 = vmatpush1.bf16.msra.mxu0 %v1342
        %1372 = vmatprep.subr.bf16.mxu0 0
        %1373 = vmatpush1.bf16.msra.mxu0 %v1341
        %1374 = vmatprep.subr.bf16.mxu0 0
        %1375 = vmatpush2.bf16.msra.mxu0 0
        %1376 = vmatprep.subr.bf16.mxu0 0
        %1377 = vmatpush2.bf16.msra.mxu0 0
        %1378 = vmatprep.subr.bf16.mxu0 0
        %1379 = vmatpush2.bf16.msra.mxu0 0
        %1380 = vmatprep.subr.bf16.mxu0 0
        %1381 = vmatpush2.bf16.msra.mxu0 0
        %1382 = vmatprep.subr.bf16.mxu0 0
        %1383 = vmatpush2.bf16.msra.mxu0 0
        %1384 = vmatprep.subr.bf16.mxu0 0
        %1385 = vmatpush2.bf16.msra.mxu0 0
        %1386 = vmatprep.subr.bf16.mxu0 0
        %1387 = vmatpush2.bf16.msra.mxu0 0
        %1388 = vmatprep.subr.bf16.mxu0 0
        %1389 = vmatpush2.bf16.msra.mxu0 0
        %1390 = vmatprep.mubr.bf16.mxu0 0
        %1391 = vmatmul.mubr.bf16.gmra.mxu0 %v1350
        %v1392 = vpop.f32.mrf.mxu0
        %v1393 = vadd.f32 %v1303, %v1392
        %v1394 = vpop.f32.mrf.mxu0
        %v1395 = vpop.f32.mrf.mxu0
        %v1396 = vadd.f32 %v1306, %v1395
        %v1397 = vpop.f32.mrf.mxu0
        %1398 = vmatprep.mubr.bf16.mxu0 0
        %1399 = vmatmul.mubr.bf16.gmra.mxu0 %v1353
        %v1400 = vpop.f32.mrf.mxu0
        %v1401 = vadd.f32 %v1311, %v1400
        %v1402 = vpop.f32.mrf.mxu0
        %v1403 = vpop.f32.mrf.mxu0
        %v1404 = vadd.f32 %v1314, %v1403
        %v1405 = vpop.f32.mrf.mxu0
        %1406 = vmatprep.mubr.bf16.mxu0 0
        %1407 = vmatmul.mubr.bf16.gmra.mxu0 %v1356
        %v1408 = vpop.f32.mrf.mxu0
        %v1409 = vadd.f32 %v1319, %v1408
        %v1410 = vpop.f32.mrf.mxu0
        %v1411 = vpop.f32.mrf.mxu0
        %v1412 = vadd.f32 %v1322, %v1411
        %v1413 = vpop.f32.mrf.mxu0
        %1414 = vdwg.mxu0
        %v1415 = vld [vmem:[%s822] sm:$0xf]
        %v1416 = vld [vmem:[%s822 + $0x4] sm:$0xf]
        %v1417 = vld [vmem:[%s822 + $0x8] sm:$0xf]
        %v1418 = vld [vmem:[%s822 + $0xc] sm:$0xf]
        %v1419 = vld [vmem:[%s822 + $0x10] sm:$0xf]
        %v1420 = vld [vmem:[%s822 + $0x14] sm:$0xf]
        %v1421 = vld [vmem:[%s822 + $0x18] sm:$0xf]
        %v1422 = vld [vmem:[%s822 + $0x1c] sm:$0xf]
        %v1431 = vunpack.c.l.b16 %v1415
        %v1432 = vunpack.c.l.b16 %v1416
        %v1433 = vunpack.c.l.b16 %v1417
        %v1434 = vunpack.c.l.b16 %v1418
        %v1435 = vunpack.c.l.b16 %v1419
        %v1436 = vunpack.c.l.b16 %v1420
        %v1437 = vunpack.c.l.b16 %v1421
        %v1438 = vunpack.c.l.b16 %v1422
        %v1439 = vpack.c.b16 %v1432, %v1431
        %v1440 = vpack.c.b16 %v1434, %v1433
        %v1441 = vpack.c.b16 %v1436, %v1435
        %v1442 = vpack.c.b16 %v1438, %v1437
        %v1448 = vsel %vm1258, %v1215, 0
        %v1451 = vsel %vm1258, %v1216, 0
        %v1454 = vsel %vm1258, %v1217, 0
        %1456 = vmatprep.subr.bf16.mxu0 0
        %1457 = vmatpush1.bf16.msra.mxu0 0
        %1458 = vmatprep.subr.bf16.mxu0 0
        %1459 = vmatpush1.bf16.msra.mxu0 0
        %1460 = vmatprep.subr.bf16.mxu0 0
        %1461 = vmatpush1.bf16.msra.mxu0 0
        %1462 = vmatprep.subr.bf16.mxu0 0
        %1463 = vmatpush1.bf16.msra.mxu0 0
        %1464 = vmatprep.subr.bf16.mxu0 0
        %1465 = vmatpush1.bf16.msra.mxu0 %v1442
        %1466 = vmatprep.subr.bf16.mxu0 0
        %1467 = vmatpush1.bf16.msra.mxu0 %v1441
        %1468 = vmatprep.subr.bf16.mxu0 0
        %1469 = vmatpush1.bf16.msra.mxu0 %v1440
        %1470 = vmatprep.subr.bf16.mxu0 0
        %1471 = vmatpush1.bf16.msra.mxu0 %v1439
        %1472 = vmatprep.subr.bf16.mxu0 0
        %1473 = vmatpush2.bf16.msra.mxu0 0
        %1474 = vmatprep.subr.bf16.mxu0 0
        %1475 = vmatpush2.bf16.msra.mxu0 0
        %1476 = vmatprep.subr.bf16.mxu0 0
        %1477 = vmatpush2.bf16.msra.mxu0 0
        %1478 = vmatprep.subr.bf16.mxu0 0
        %1479 = vmatpush2.bf16.msra.mxu0 0
        %1480 = vmatprep.subr.bf16.mxu0 0
        %1481 = vmatpush2.bf16.msra.mxu0 0
        %1482 = vmatprep.subr.bf16.mxu0 0
        %1483 = vmatpush2.bf16.msra.mxu0 0
        %1484 = vmatprep.subr.bf16.mxu0 0
        %1485 = vmatpush2.bf16.msra.mxu0 0
        %1486 = vmatprep.subr.bf16.mxu0 0
        %1487 = vmatpush2.bf16.msra.mxu0 0
        %1488 = vmatprep.mubr.bf16.mxu0 0
        %1489 = vmatmul.mubr.bf16.gmra.mxu0 %v1448
        %v1490 = vpop.f32.mrf.mxu0
        %v1491 = vadd.f32 0.0, %v1490
        %v1492 = vpop.f32.mrf.mxu0
        %v1493 = vpop.f32.mrf.mxu0
        %v1494 = vadd.f32 0.0, %v1493
        %v1495 = vpop.f32.mrf.mxu0
        %1496 = vmatprep.mubr.bf16.mxu0 0
        %1497 = vmatmul.mubr.bf16.gmra.mxu0 %v1451
        %v1498 = vpop.f32.mrf.mxu0
        %v1499 = vadd.f32 0.0, %v1498
        %v1500 = vpop.f32.mrf.mxu0
        %v1501 = vpop.f32.mrf.mxu0
        %v1502 = vadd.f32 0.0, %v1501
        %v1503 = vpop.f32.mrf.mxu0
        %1504 = vmatprep.mubr.bf16.mxu0 0
        %1505 = vmatmul.mubr.bf16.gmra.mxu0 %v1454
        %v1506 = vpop.f32.mrf.mxu0
        %v1507 = vadd.f32 0.0, %v1506
        %v1508 = vpop.f32.mrf.mxu0
        %v1509 = vpop.f32.mrf.mxu0
        %v1510 = vadd.f32 0.0, %v1509
        %v1511 = vpop.f32.mrf.mxu0
        %1512 = vdwg.mxu0
        %v1513 = vadd.f32 %v1393, %v1491
        %v1514 = vadd.f32 %v1396, %v1494
        %v1515 = vadd.f32 %v1401, %v1499
        %v1516 = vadd.f32 %v1404, %v1502
        %v1517 = vadd.f32 %v1409, %v1507
        %v1518 = vadd.f32 %v1412, %v1510
        %v1519 = vld [vmem:[%s942] sm:$0x1]
        %v1521 = vlaneseq
        %v1522 = vshrl.u32 %v1521, 7
        %v1523 = vsub.s32 0, %v1522
        %v1524 = vrot.slane %v1519, %v1523
        %v1526 = vadd.f32 %v1513, %v1524
        %v1527 = vadd.f32 %v1514, %v1524
        %v1528 = vadd.f32 %v1515, %v1524
        %v1529 = vadd.f32 %v1516, %v1524
        %v1530 = vadd.f32 %v1517, %v1524
        %v1531 = vadd.f32 %v1518, %v1524
        %v1532 = vld [vmem:[%s831] sm:$0xf]
        %v1533 = vld [vmem:[%s831 + $0x4] sm:$0xf]
        %v1534 = vld [vmem:[%s831 + $0x8] sm:$0xf]
        %v1535 = vld [vmem:[%s831 + $0xc] sm:$0xf]
        %v1536 = vld [vmem:[%s831 + $0x10] sm:$0xf]
        %v1537 = vld [vmem:[%s831 + $0x14] sm:$0xf]
        %v1538 = vld [vmem:[%s831 + $0x18] sm:$0xf]
        %v1539 = vld [vmem:[%s831 + $0x1c] sm:$0xf]
        %v1540 = vld [vmem:[%s840] sm:$0xf]
        %v1541 = vld [vmem:[%s840 + $0x4] sm:$0xf]
        %v1542 = vld [vmem:[%s840 + $0x8] sm:$0xf]
        %v1543 = vld [vmem:[%s840 + $0xc] sm:$0xf]
        %v1544 = vld [vmem:[%s840 + $0x10] sm:$0xf]
        %v1545 = vld [vmem:[%s840 + $0x14] sm:$0xf]
        %v1546 = vld [vmem:[%s840 + $0x18] sm:$0xf]
        %v1547 = vld [vmem:[%s840 + $0x1c] sm:$0xf]
        %v1556 = vunpack.c.l.b16 %v1540
        %v1557 = vunpack.c.l.b16 %v1541
        %v1558 = vunpack.c.l.b16 %v1542
        %v1559 = vunpack.c.l.b16 %v1543
        %v1560 = vunpack.c.l.b16 %v1544
        %v1561 = vunpack.c.l.b16 %v1545
        %v1562 = vunpack.c.l.b16 %v1546
        %v1563 = vunpack.c.l.b16 %v1547
        %v1564 = vpack.c.b16 %v1557, %v1556
        %v1565 = vpack.c.b16 %v1559, %v1558
        %v1566 = vpack.c.b16 %v1561, %v1560
        %v1567 = vpack.c.b16 %v1563, %v1562
        %1572 = vmatprep.subr.bf16.mxu0 0
        %1573 = vmatpush1.bf16.msra.mxu0 0
        %1574 = vmatprep.subr.bf16.mxu0 0
        %1575 = vmatpush1.bf16.msra.mxu0 0
        %1576 = vmatprep.subr.bf16.mxu0 0
        %1577 = vmatpush1.bf16.msra.mxu0 0
        %1578 = vmatprep.subr.bf16.mxu0 0
        %1579 = vmatpush1.bf16.msra.mxu0 0
        %1580 = vmatprep.subr.bf16.mxu0 0
        %1581 = vmatpush1.bf16.msra.mxu0 %v1567
        %1582 = vmatprep.subr.bf16.mxu0 0
        %1583 = vmatpush1.bf16.msra.mxu0 %v1566
        %1584 = vmatprep.subr.bf16.mxu0 0
        %1585 = vmatpush1.bf16.msra.mxu0 %v1565
        %1586 = vmatprep.subr.bf16.mxu0 0
        %1587 = vmatpush1.bf16.msra.mxu0 %v1564
        %1588 = vmatprep.subr.bf16.mxu0 0
        %1589 = vmatpush2.bf16.msra.mxu0 0
        %1590 = vmatprep.subr.bf16.mxu0 0
        %1591 = vmatpush2.bf16.msra.mxu0 0
        %1592 = vmatprep.subr.bf16.mxu0 0
        %1593 = vmatpush2.bf16.msra.mxu0 0
        %1594 = vmatprep.subr.bf16.mxu0 0
        %1595 = vmatpush2.bf16.msra.mxu0 0
        %1596 = vmatprep.subr.bf16.mxu0 0
        %1597 = vmatpush2.bf16.msra.mxu0 0
        %1598 = vmatprep.subr.bf16.mxu0 0
        %1599 = vmatpush2.bf16.msra.mxu0 0
        %1600 = vmatprep.subr.bf16.mxu0 0
        %1601 = vmatpush2.bf16.msra.mxu0 0
        %1602 = vmatprep.subr.bf16.mxu0 0
        %1603 = vmatpush2.bf16.msra.mxu0 0
        %1604 = vmatprep.mubr.bf16.mxu0 0
        %1605 = vmatmul.mubr.bf16.gmra.mxu0 %v1260
        %v1606 = vpop.f32.mrf.mxu0
        %v1607 = vadd.f32 0.0, %v1606
        %v1608 = vpop.f32.mrf.mxu0
        %v1609 = vpop.f32.mrf.mxu0
        %v1610 = vadd.f32 0.0, %v1609
        %v1611 = vpop.f32.mrf.mxu0
        %1612 = vmatprep.mubr.bf16.mxu0 0
        %1613 = vmatmul.mubr.bf16.gmra.mxu0 %v1263
        %v1614 = vpop.f32.mrf.mxu0
        %v1615 = vadd.f32 0.0, %v1614
        %v1616 = vpop.f32.mrf.mxu0
        %v1617 = vpop.f32.mrf.mxu0
        %v1618 = vadd.f32 0.0, %v1617
        %v1619 = vpop.f32.mrf.mxu0
        %1620 = vmatprep.mubr.bf16.mxu0 0
        %1621 = vmatmul.mubr.bf16.gmra.mxu0 %v1266
        %v1622 = vpop.f32.mrf.mxu0
        %v1623 = vadd.f32 0.0, %v1622
        %v1624 = vpop.f32.mrf.mxu0
        %v1625 = vpop.f32.mrf.mxu0
        %v1626 = vadd.f32 0.0, %v1625
        %v1627 = vpop.f32.mrf.mxu0
        %1628 = vdwg.mxu0
        %v1637 = vunpack.c.l.b16 %v1532
        %v1638 = vunpack.c.l.b16 %v1533
        %v1639 = vunpack.c.l.b16 %v1534
        %v1640 = vunpack.c.l.b16 %v1535
        %v1641 = vunpack.c.l.b16 %v1536
        %v1642 = vunpack.c.l.b16 %v1537
        %v1643 = vunpack.c.l.b16 %v1538
        %v1644 = vunpack.c.l.b16 %v1539
        %v1645 = vpack.c.b16 %v1638, %v1637
        %v1646 = vpack.c.b16 %v1640, %v1639
        %v1647 = vpack.c.b16 %v1642, %v1641
        %v1648 = vpack.c.b16 %v1644, %v1643
        %1653 = vmatprep.subr.bf16.mxu0 0
        %1654 = vmatpush1.bf16.msra.mxu0 0
        %1655 = vmatprep.subr.bf16.mxu0 0
        %1656 = vmatpush1.bf16.msra.mxu0 0
        %1657 = vmatprep.subr.bf16.mxu0 0
        %1658 = vmatpush1.bf16.msra.mxu0 0
        %1659 = vmatprep.subr.bf16.mxu0 0
        %1660 = vmatpush1.bf16.msra.mxu0 0
        %1661 = vmatprep.subr.bf16.mxu0 0
        %1662 = vmatpush1.bf16.msra.mxu0 %v1648
        %1663 = vmatprep.subr.bf16.mxu0 0
        %1664 = vmatpush1.bf16.msra.mxu0 %v1647
        %1665 = vmatprep.subr.bf16.mxu0 0
        %1666 = vmatpush1.bf16.msra.mxu0 %v1646
        %1667 = vmatprep.subr.bf16.mxu0 0
        %1668 = vmatpush1.bf16.msra.mxu0 %v1645
        %1669 = vmatprep.subr.bf16.mxu0 0
        %1670 = vmatpush2.bf16.msra.mxu0 0
        %1671 = vmatprep.subr.bf16.mxu0 0
        %1672 = vmatpush2.bf16.msra.mxu0 0
        %1673 = vmatprep.subr.bf16.mxu0 0
        %1674 = vmatpush2.bf16.msra.mxu0 0
        %1675 = vmatprep.subr.bf16.mxu0 0
        %1676 = vmatpush2.bf16.msra.mxu0 0
        %1677 = vmatprep.subr.bf16.mxu0 0
        %1678 = vmatpush2.bf16.msra.mxu0 0
        %1679 = vmatprep.subr.bf16.mxu0 0
        %1680 = vmatpush2.bf16.msra.mxu0 0
        %1681 = vmatprep.subr.bf16.mxu0 0
        %1682 = vmatpush2.bf16.msra.mxu0 0
        %1683 = vmatprep.subr.bf16.mxu0 0
        %1684 = vmatpush2.bf16.msra.mxu0 0
        %1685 = vmatprep.mubr.bf16.mxu0 0
        %1686 = vmatmul.mubr.bf16.gmra.mxu0 %v1350
        %v1687 = vpop.f32.mrf.mxu0
        %v1688 = vadd.f32 %v1607, %v1687
        %v1689 = vpop.f32.mrf.mxu0
        %v1690 = vpop.f32.mrf.mxu0
        %v1691 = vadd.f32 %v1610, %v1690
        %v1692 = vpop.f32.mrf.mxu0
        %1693 = vmatprep.mubr.bf16.mxu0 0
        %1694 = vmatmul.mubr.bf16.gmra.mxu0 %v1353
        %v1695 = vpop.f32.mrf.mxu0
        %v1696 = vadd.f32 %v1615, %v1695
        %v1697 = vpop.f32.mrf.mxu0
        %v1698 = vpop.f32.mrf.mxu0
        %v1699 = vadd.f32 %v1618, %v1698
        %v1700 = vpop.f32.mrf.mxu0
        %1701 = vmatprep.mubr.bf16.mxu0 0
        %1702 = vmatmul.mubr.bf16.gmra.mxu0 %v1356
        %v1703 = vpop.f32.mrf.mxu0
        %v1704 = vadd.f32 %v1623, %v1703
        %v1705 = vpop.f32.mrf.mxu0
        %v1706 = vpop.f32.mrf.mxu0
        %v1707 = vadd.f32 %v1626, %v1706
        %v1708 = vpop.f32.mrf.mxu0
        %1709 = vdwg.mxu0
        %v1710 = vld [vmem:[%s849] sm:$0xf]
        %v1711 = vld [vmem:[%s849 + $0x4] sm:$0xf]
        %v1712 = vld [vmem:[%s849 + $0x8] sm:$0xf]
        %v1713 = vld [vmem:[%s849 + $0xc] sm:$0xf]
        %v1714 = vld [vmem:[%s849 + $0x10] sm:$0xf]
        %v1715 = vld [vmem:[%s849 + $0x14] sm:$0xf]
        %v1716 = vld [vmem:[%s849 + $0x18] sm:$0xf]
        %v1717 = vld [vmem:[%s849 + $0x1c] sm:$0xf]
        %v1726 = vunpack.c.l.b16 %v1710
        %v1727 = vunpack.c.l.b16 %v1711
        %v1728 = vunpack.c.l.b16 %v1712
        %v1729 = vunpack.c.l.b16 %v1713
        %v1730 = vunpack.c.l.b16 %v1714
        %v1731 = vunpack.c.l.b16 %v1715
        %v1732 = vunpack.c.l.b16 %v1716
        %v1733 = vunpack.c.l.b16 %v1717
        %v1734 = vpack.c.b16 %v1727, %v1726
        %v1735 = vpack.c.b16 %v1729, %v1728
        %v1736 = vpack.c.b16 %v1731, %v1730
        %v1737 = vpack.c.b16 %v1733, %v1732
        %1742 = vmatprep.subr.bf16.mxu0 0
        %1743 = vmatpush1.bf16.msra.mxu0 0
        %1744 = vmatprep.subr.bf16.mxu0 0
        %1745 = vmatpush1.bf16.msra.mxu0 0
        %1746 = vmatprep.subr.bf16.mxu0 0
        %1747 = vmatpush1.bf16.msra.mxu0 0
        %1748 = vmatprep.subr.bf16.mxu0 0
        %1749 = vmatpush1.bf16.msra.mxu0 0
        %1750 = vmatprep.subr.bf16.mxu0 0
        %1751 = vmatpush1.bf16.msra.mxu0 %v1737
        %1752 = vmatprep.subr.bf16.mxu0 0
        %1753 = vmatpush1.bf16.msra.mxu0 %v1736
        %1754 = vmatprep.subr.bf16.mxu0 0
        %1755 = vmatpush1.bf16.msra.mxu0 %v1735
        %1756 = vmatprep.subr.bf16.mxu0 0
        %1757 = vmatpush1.bf16.msra.mxu0 %v1734
        %1758 = vmatprep.subr.bf16.mxu0 0
        %1759 = vmatpush2.bf16.msra.mxu0 0
        %1760 = vmatprep.subr.bf16.mxu0 0
        %1761 = vmatpush2.bf16.msra.mxu0 0
        %1762 = vmatprep.subr.bf16.mxu0 0
        %1763 = vmatpush2.bf16.msra.mxu0 0
        %1764 = vmatprep.subr.bf16.mxu0 0
        %1765 = vmatpush2.bf16.msra.mxu0 0
        %1766 = vmatprep.subr.bf16.mxu0 0
        %1767 = vmatpush2.bf16.msra.mxu0 0
        %1768 = vmatprep.subr.bf16.mxu0 0
        %1769 = vmatpush2.bf16.msra.mxu0 0
        %1770 = vmatprep.subr.bf16.mxu0 0
        %1771 = vmatpush2.bf16.msra.mxu0 0
        %1772 = vmatprep.subr.bf16.mxu0 0
        %1773 = vmatpush2.bf16.msra.mxu0 0
        %1774 = vmatprep.mubr.bf16.mxu0 0
        %1775 = vmatmul.mubr.bf16.gmra.mxu0 %v1448
        %v1776 = vpop.f32.mrf.mxu0
        %v1777 = vadd.f32 0.0, %v1776
        %v1778 = vpop.f32.mrf.mxu0
        %v1779 = vpop.f32.mrf.mxu0
        %v1780 = vadd.f32 0.0, %v1779
        %v1781 = vpop.f32.mrf.mxu0
        %1782 = vmatprep.mubr.bf16.mxu0 0
        %1783 = vmatmul.mubr.bf16.gmra.mxu0 %v1451
        %v1784 = vpop.f32.mrf.mxu0
        %v1785 = vadd.f32 0.0, %v1784
        %v1786 = vpop.f32.mrf.mxu0
        %v1787 = vpop.f32.mrf.mxu0
        %v1788 = vadd.f32 0.0, %v1787
        %v1789 = vpop.f32.mrf.mxu0
        %1790 = vmatprep.mubr.bf16.mxu0 0
        %1791 = vmatmul.mubr.bf16.gmra.mxu0 %v1454
        %v1792 = vpop.f32.mrf.mxu0
        %v1793 = vadd.f32 0.0, %v1792
        %v1794 = vpop.f32.mrf.mxu0
        %v1795 = vpop.f32.mrf.mxu0
        %v1796 = vadd.f32 0.0, %v1795
        %v1797 = vpop.f32.mrf.mxu0
        %1798 = vdwg.mxu0
        %v1799 = vadd.f32 %v1688, %v1777
        %v1800 = vadd.f32 %v1691, %v1780
        %v1801 = vadd.f32 %v1696, %v1785
        %v1802 = vadd.f32 %v1699, %v1788
        %v1803 = vadd.f32 %v1704, %v1793
        %v1804 = vadd.f32 %v1707, %v1796
        %v1805 = vld [vmem:[%s945] sm:$0x1]
        %v1807 = vlaneseq
        %v1808 = vshrl.u32 %v1807, 7
        %v1809 = vsub.s32 0, %v1808
        %v1810 = vrot.slane %v1805, %v1809
        %v1812 = vadd.f32 %v1799, %v1810
        %v1813 = vadd.f32 %v1800, %v1810
        %v1814 = vadd.f32 %v1801, %v1810
        %v1815 = vadd.f32 %v1802, %v1810
        %v1816 = vadd.f32 %v1803, %v1810
        %v1817 = vadd.f32 %v1804, %v1810
        %v1818 = vsub.f32 0.0, %v1526
        %v1819 = vsub.f32 0.0, %v1527
        %v1820 = vsub.f32 0.0, %v1528
        %v1821 = vsub.f32 0.0, %v1529
        %v1822 = vsub.f32 0.0, %v1530
        %v1823 = vsub.f32 0.0, %v1531
        %v1824 = vmul.f32 %v1818, 1.442695
        %v1825 = vpow.pop %v1824
        %v1826 = vmul.f32 %v1819, 1.442695
        %v1827 = vpow.pop %v1826
        %v1828 = vmul.f32 %v1820, 1.442695
        %v1829 = vpow.pop %v1828
        %v1830 = vmul.f32 %v1821, 1.442695
        %v1831 = vpow.pop %v1830
        %v1832 = vmul.f32 %v1822, 1.442695
        %v1833 = vpow.pop %v1832
        %v1834 = vmul.f32 %v1823, 1.442695
        %v1835 = vpow.pop %v1834
        %v1836 = vadd.f32 %v1825, 1.0
        %v1837 = vadd.f32 %v1827, 1.0
        %v1838 = vadd.f32 %v1829, 1.0
        %v1839 = vadd.f32 %v1831, 1.0
        %v1840 = vadd.f32 %v1833, 1.0
        %v1841 = vadd.f32 %v1835, 1.0
        %v1842 = vrcp.pop %v1836
        %v1843 = vmul.f32 1.0, %v1842
        %v1844 = vrcp.pop %v1837
        %v1845 = vmul.f32 1.0, %v1844
        %v1846 = vrcp.pop %v1838
        %v1847 = vmul.f32 1.0, %v1846
        %v1848 = vrcp.pop %v1839
        %v1849 = vmul.f32 1.0, %v1848
        %v1850 = vrcp.pop %v1840
        %v1851 = vmul.f32 1.0, %v1850
        %v1852 = vrcp.pop %v1841
        %v1853 = vmul.f32 1.0, %v1852
        %v1854 = vmax.f32 %v1812, 0.0
        %v1855 = vmax.f32 %v1813, 0.0
        %v1856 = vmax.f32 %v1814, 0.0
        %v1857 = vmax.f32 %v1815, 0.0
        %v1858 = vmax.f32 %v1816, 0.0
        %v1859 = vmax.f32 %v1817, 0.0
        %v1860 = vand.u32 2147483647, %v1812
        %v1861 = vand.u32 2147483647, %v1813
        %v1862 = vand.u32 2147483647, %v1814
        %v1863 = vand.u32 2147483647, %v1815
        %v1864 = vand.u32 2147483647, %v1816
        %v1865 = vand.u32 2147483647, %v1817
        %v1866 = vsub.f32 0.0, %v1860
        %v1867 = vsub.f32 0.0, %v1861
        %v1868 = vsub.f32 0.0, %v1862
        %v1869 = vsub.f32 0.0, %v1863
        %v1870 = vsub.f32 0.0, %v1864
        %v1871 = vsub.f32 0.0, %v1865
        %v1872 = vmul.f32 %v1866, 1.442695
        %v1873 = vpow.pop %v1872
        %v1874 = vmul.f32 %v1867, 1.442695
        %v1875 = vpow.pop %v1874
        %v1876 = vmul.f32 %v1868, 1.442695
        %v1877 = vpow.pop %v1876
        %v1878 = vmul.f32 %v1869, 1.442695
        %v1879 = vpow.pop %v1878
        %v1880 = vmul.f32 %v1870, 1.442695
        %v1881 = vpow.pop %v1880
        %v1882 = vmul.f32 %v1871, 1.442695
        %v1883 = vpow.pop %v1882
        %v1884 = vadd.f32 %v1873, 1.0
        %v1885 = vadd.f32 %v1875, 1.0
        %v1886 = vadd.f32 %v1877, 1.0
        %v1887 = vadd.f32 %v1879, 1.0
        %v1888 = vadd.f32 %v1881, 1.0
        %v1889 = vadd.f32 %v1883, 1.0
        %v1890 = vlog2.pop %v1884
        %v1891 = vmul.f32 %v1890, 0.6931472
        %v1892 = vlog2.pop %v1885
        %v1893 = vmul.f32 %v1892, 0.6931472
        %v1894 = vlog2.pop %v1886
        %v1895 = vmul.f32 %v1894, 0.6931472
        %v1896 = vlog2.pop %v1887
        %v1897 = vmul.f32 %v1896, 0.6931472
        %v1898 = vlog2.pop %v1888
        %v1899 = vmul.f32 %v1898, 0.6931472
        %v1900 = vlog2.pop %v1889
        %v1901 = vmul.f32 %v1900, 0.6931472
        %v1902 = vadd.f32 %v1854, %v1891
        %v1903 = vadd.f32 %v1855, %v1893
        %v1904 = vadd.f32 %v1856, %v1895
        %v1905 = vadd.f32 %v1857, %v1897
        %v1906 = vadd.f32 %v1858, %v1899
        %v1907 = vadd.f32 %v1859, %v1901
        %v1908 = vmul.f32 %v1843, %v1902
        %v1909 = vmul.f32 %v1845, %v1903
        %v1910 = vmul.f32 %v1847, %v1904
        %v1911 = vmul.f32 %v1849, %v1905
        %v1912 = vmul.f32 %v1851, %v1906
        %v1913 = vmul.f32 %v1853, %v1907
        %v1914 = vld [vmem:[#allocation7] sm:$0xff]
        %v1915 = vld [vmem:[#allocation7 + $0x8] sm:$0xff]
        %vm1916 = vcmask 392192
        %v1918 = vsel %vm1916, %v1914, 0
        %v1921 = vsel %vm1916, %v1915, 0
        %1923 = vmatprep.subr.mxu0 0.0
        %1924 = vmatpush1.msra.mxu0 0.0
        %1925 = vmatprep.subr.mxu0 0.0
        %1926 = vmatpush1.msra.mxu0 0.0
        %1927 = vmatprep.subr.mxu0 0.0
        %1928 = vmatpush1.msra.mxu0 0.0
        %1929 = vmatprep.subr.mxu0 0.0
        %1930 = vmatpush1.msra.mxu0 0.0
        %1931 = vmatprep.subr.mxu0 0.0
        %1932 = vmatpush1.msra.mxu0 0.0
        %1933 = vmatprep.subr.mxu0 0.0
        %1934 = vmatpush1.msra.mxu0 0.0
        %1935 = vmatprep.subr.mxu0 0.0
        %1936 = vmatpush1.msra.mxu0 0.0
        %1937 = vmatprep.subr.mxu0 0.0
        %1938 = vmatpush1.msra.mxu0 0.0
        %1939 = vmatprep.subr.mxu0 0.0
        %1940 = vmatpush1.msra.mxu0 0.0
        %1941 = vmatprep.subr.mxu0 0.0
        %1942 = vmatpush1.msra.mxu0 0.0
        %1943 = vmatprep.subr.mxu0 0.0
        %1944 = vmatpush1.msra.mxu0 %v1913
        %1945 = vmatprep.subr.mxu0 0.0
        %1946 = vmatpush1.msra.mxu0 %v1912
        %1947 = vmatprep.subr.mxu0 0.0
        %1948 = vmatpush1.msra.mxu0 %v1911
        %1949 = vmatprep.subr.mxu0 0.0
        %1950 = vmatpush1.msra.mxu0 %v1910
        %1951 = vmatprep.subr.mxu0 0.0
        %1952 = vmatpush1.msra.mxu0 %v1909
        %1953 = vmatprep.subr.mxu0 0.0
        %1954 = vmatpush1.msra.mxu0 %v1908
        %1955 = vmatprep.subr.mxu0 0.0
        %1956 = vmatpush2.msra.mxu0 0.0
        %1957 = vmatprep.subr.mxu0 0.0
        %1958 = vmatpush2.msra.mxu0 0.0
        %1959 = vmatprep.subr.mxu0 0.0
        %1960 = vmatpush2.msra.mxu0 0.0
        %1961 = vmatprep.subr.mxu0 0.0
        %1962 = vmatpush2.msra.mxu0 0.0
        %1963 = vmatprep.subr.mxu0 0.0
        %1964 = vmatpush2.msra.mxu0 0.0
        %1965 = vmatprep.subr.mxu0 0.0
        %1966 = vmatpush2.msra.mxu0 0.0
        %1967 = vmatprep.subr.mxu0 0.0
        %1968 = vmatpush2.msra.mxu0 0.0
        %1969 = vmatprep.subr.mxu0 0.0
        %1970 = vmatpush2.msra.mxu0 0.0
        %1971 = vmatprep.subr.mxu0 0.0
        %1972 = vmatpush2.msra.mxu0 0.0
        %1973 = vmatprep.subr.mxu0 0.0
        %1974 = vmatpush2.msra.mxu0 0.0
        %1975 = vmatprep.subr.mxu0 0.0
        %1976 = vmatpush2.msra.mxu0 0.0
        %1977 = vmatprep.subr.mxu0 0.0
        %1978 = vmatpush2.msra.mxu0 0.0
        %1979 = vmatprep.subr.mxu0 0.0
        %1980 = vmatpush2.msra.mxu0 0.0
        %1981 = vmatprep.subr.mxu0 0.0
        %1982 = vmatpush2.msra.mxu0 0.0
        %1983 = vmatprep.subr.mxu0 0.0
        %1984 = vmatpush2.msra.mxu0 0.0
        %1985 = vmatprep.subr.mxu0 0.0
        %1986 = vmatpush2.msra.mxu0 0.0
        %1987 = vmatprep.mubr.f32.mxu0 0.0
        %1988 = vmatmul.mubr.f32.gmra.mxu0 %v1918
        %v1989 = vpop.f32.mrf.mxu0
        %v1990 = vadd.f32 0.0, %v1989
        %v1991 = vpop.f32.mrf.mxu0
        %1992 = vmatprep.mubr.f32.mxu0 0.0
        %1993 = vmatmul.mubr.f32.gmra.mxu0 %v1921
        %v1994 = vpop.f32.mrf.mxu0
        %v1995 = vadd.f32 0.0, %v1994
        %v1996 = vpop.f32.mrf.mxu0
        %1997 = vdwg.mxu0
        %v1998 = vadd.f32 %v962, %v1990
        %v1999 = vadd.f32 %v963, %v1995
        %v2000 = vld [vmem:[%s948] sm:$0x1]
        %v2002 = vlaneseq
        %v2003 = vshrl.u32 %v2002, 7
        %v2004 = vsub.s32 0, %v2003
        %v2005 = vrot.slane %v2000, %v2004
        %v2007 = vmul.f32 %v1998, %v2005
        %v2008 = vmul.f32 %v1999, %v2005
        %v2009 = vld [vmem:[%s951] sm:$0x1]
        %v2011 = vlaneseq
        %v2012 = vshrl.u32 %v2011, 7
        %v2013 = vsub.s32 0, %v2012
        %v2014 = vrot.slane %v2009, %v2013
        %v2016 = vadd.f32 %v2007, %v2014
        %v2017 = vadd.f32 %v2008, %v2014
        %v2018 = vmax.f32 %v2016, 0.0
        %v2019 = vmax.f32 %v2017, 0.0
        %2020 = vst.msk [vmem:[#allocation2] sm:$0xff] %vm1258, %v2018
        %2021 = vst.msk [vmem:[#allocation2 + $0x8] sm:$0xff] %vm1258, %v2019
        %p2022 = scmp.eq.s32.totalorder %s47, 5
        // Predicated region
        $region141: #{tpu_custom_call.1} parent=99 // pred_check
          %p2023 = pneg %p2022
        $region142: #{tpu_custom_call.1} parent=99 // pred_check_branch
          %2025 = sbr.rel (%p2023) target = $region144
        $region143: #{tpu_custom_call.1} parent=99 // pred_region
          %v2026 = vld [vmem:[%s18] sm:$0x1]
          %v2028 = vlaneseq
          %v2029 = vshrl.u32 %v2028, 7
          %v2030 = vsub.s32 0, %v2029
          %v2031 = vrot.slane %v2026, %v2030
          %v2033 = vmul.f32 %v2018, %v2031
          %v2034 = vmul.f32 %v2019, %v2031
          %v2035 = vsel %vm1258, %v2033, 0.0
          %2036 = vadd.xlane.f32.xlu0 %v2035
          %v2037 = vpop.xlane.xlu0 %2036
          %v2038 = vsel %vm1258, %v2034, 0.0
          %2039 = vadd.xlane.f32.xlu0 %v2038
          %v2040 = vpop.xlane.xlu0 %2039
          %v2041 = vld [vmem:[#allocation3] sm:$0x1]
          %v2043 = vlaneseq
          %v2044 = vshrl.u32 %v2043, 7
          %v2045 = vsub.s32 0, %v2044
          %v2046 = vrot.slane %v2041, %v2045
          %v2048 = vadd.f32 %v2037, %v2046
          %v2049 = vadd.f32 %v2040, %v2046
          %vm2050 = vcmask 7168
          %2051 = vst.msk [vmem:[%s21] sm:$0xff] %vm2050, %v2048
          %2052 = vst.msk [vmem:[%s21 + $0x8] sm:$0xff] %vm2050, %v2049
          %v2053 = vld [vmem:[#allocation9] sm:$0x3]
          %v2055 = vsel %vm970, %v2053, 0
          %2057 = vmatprep.subr.mxu0 0.0
          %2058 = vmatpush1.msra.mxu0 0.0
          %2059 = vmatprep.subr.mxu0 0.0
          %2060 = vmatpush1.msra.mxu0 0.0
          %2061 = vmatprep.subr.mxu0 0.0
          %2062 = vmatpush1.msra.mxu0 0.0
          %2063 = vmatprep.subr.mxu0 0.0
          %2064 = vmatpush1.msra.mxu0 0.0
          %2065 = vmatprep.subr.mxu0 0.0
          %2066 = vmatpush1.msra.mxu0 0.0
          %2067 = vmatprep.subr.mxu0 0.0
          %2068 = vmatpush1.msra.mxu0 0.0
          %2069 = vmatprep.subr.mxu0 0.0
          %2070 = vmatpush1.msra.mxu0 0.0
          %2071 = vmatprep.subr.mxu0 0.0
          %2072 = vmatpush1.msra.mxu0 0.0
          %2073 = vmatprep.subr.mxu0 0.0
          %2074 = vmatpush1.msra.mxu0 0.0
          %2075 = vmatprep.subr.mxu0 0.0
          %2076 = vmatpush1.msra.mxu0 0.0
          %2077 = vmatprep.subr.mxu0 0.0
          %2078 = vmatpush1.msra.mxu0 0.0
          %2079 = vmatprep.subr.mxu0 0.0
          %2080 = vmatpush1.msra.mxu0 0.0
          %2081 = vmatprep.subr.mxu0 0.0
          %2082 = vmatpush1.msra.mxu0 0.0
          %2083 = vmatprep.subr.mxu0 0.0
          %2084 = vmatpush1.msra.mxu0 0.0
          %2085 = vmatprep.subr.mxu0 0.0
          %2086 = vmatpush1.msra.mxu0 %v2019
          %2087 = vmatprep.subr.mxu0 0.0
          %2088 = vmatpush1.msra.mxu0 %v2018
          %2089 = vmatprep.subr.mxu0 0.0
          %2090 = vmatpush2.msra.mxu0 0.0
          %2091 = vmatprep.subr.mxu0 0.0
          %2092 = vmatpush2.msra.mxu0 0.0
          %2093 = vmatprep.subr.mxu0 0.0
          %2094 = vmatpush2.msra.mxu0 0.0
          %2095 = vmatprep.subr.mxu0 0.0
          %2096 = vmatpush2.msra.mxu0 0.0
          %2097 = vmatprep.subr.mxu0 0.0
          %2098 = vmatpush2.msra.mxu0 0.0
          %2099 = vmatprep.subr.mxu0 0.0
          %2100 = vmatpush2.msra.mxu0 0.0
          %2101 = vmatprep.subr.mxu0 0.0
          %2102 = vmatpush2.msra.mxu0 0.0
          %2103 = vmatprep.subr.mxu0 0.0
          %2104 = vmatpush2.msra.mxu0 0.0
          %2105 = vmatprep.subr.mxu0 0.0
          %2106 = vmatpush2.msra.mxu0 0.0
          %2107 = vmatprep.subr.mxu0 0.0
          %2108 = vmatpush2.msra.mxu0 0.0
          %2109 = vmatprep.subr.mxu0 0.0
          %2110 = vmatpush2.msra.mxu0 0.0
          %2111 = vmatprep.subr.mxu0 0.0
          %2112 = vmatpush2.msra.mxu0 0.0
          %2113 = vmatprep.subr.mxu0 0.0
          %2114 = vmatpush2.msra.mxu0 0.0
          %2115 = vmatprep.subr.mxu0 0.0
          %2116 = vmatpush2.msra.mxu0 0.0
          %2117 = vmatprep.subr.mxu0 0.0
          %2118 = vmatpush2.msra.mxu0 0.0
          %2119 = vmatprep.subr.mxu0 0.0
          %2120 = vmatpush2.msra.mxu0 0.0
          %2121 = vmatprep.mubr.f32.mxu0 0.0
          %2122 = vmatmul.mubr.f32.gmra.mxu0 %v2055
          %v2123 = vpop.f32.mrf.mxu0
          %v2124 = vadd.f32 0.0, %v2123
          %v2125 = vpop.f32.mrf.mxu0
          %2126 = vdwg.mxu0
          %v2127 = vpack.c.bf16 %v2124, %v2124
          %v2128 = vld [vmem:[%s16] sm:$0xff]
          %v2129 = vld [vmem:[%s16 + $0x8] sm:$0xff]
          %v2130 = vld [vmem:[%s16 + $0x10] sm:$0xff]
          %v2131 = vld [vmem:[%s16 + $0x18] sm:$0xff]
          %v2132 = vld [vmem:[%s16 + $0x20] sm:$0xff]
          %v2133 = vld [vmem:[%s16 + $0x28] sm:$0xff]
          %v2134 = vld [vmem:[%s16 + $0x30] sm:$0xff]
          %v2135 = vld [vmem:[%s16 + $0x38] sm:$0xff]
          %v2136 = vld [vmem:[%s17] sm:$0x3]
          %v2138 = vlaneseq
          %v2139 = vshrl.u32 %v2138, 7
          %v2140 = vsub.s32 0, %v2139
          %v2141 = vrot.slane %v2136, %v2140
          %v2142 = vlaneseq
          %v2143 = vshrl.u32 %v2142, 7
          %v2144 = vsub.s32 1, %v2143
          %v2145 = vrot.slane %v2136, %v2144
          %v2156 = vunpack.c.l.b16 %v2128
          %v2157 = vunpack.c.h.b16 %v2128
          %v2158 = vunpack.c.l.b16 %v2129
          %v2159 = vunpack.c.h.b16 %v2129
          %v2160 = vunpack.c.l.b16 %v2130
          %v2161 = vunpack.c.h.b16 %v2130
          %v2162 = vunpack.c.l.b16 %v2131
          %v2163 = vunpack.c.h.b16 %v2131
          %v2164 = vunpack.c.l.b16 %v2132
          %v2165 = vunpack.c.h.b16 %v2132
          %v2166 = vunpack.c.l.b16 %v2133
          %v2167 = vunpack.c.h.b16 %v2133
          %v2168 = vunpack.c.l.b16 %v2134
          %v2169 = vunpack.c.h.b16 %v2134
          %v2170 = vunpack.c.l.b16 %v2135
          %v2171 = vunpack.c.h.b16 %v2135
          %v2172 = vpack.c.b16 %v2158, %v2156
          %v2173 = vpack.c.b16 %v2159, %v2157
          %v2174 = vpack.c.b16 %v2162, %v2160
          %v2175 = vpack.c.b16 %v2163, %v2161
          %v2176 = vpack.c.b16 %v2166, %v2164
          %v2177 = vpack.c.b16 %v2167, %v2165
          %v2178 = vpack.c.b16 %v2170, %v2168
          %v2179 = vpack.c.b16 %v2171, %v2169
          %v2189 = vsel %vm1258, %v2127, 0
          %2191 = vmatprep.subr.bf16.mxu0 0
          %2192 = vmatpush1.bf16.msra.mxu0 0
          %2193 = vmatprep.subr.bf16.mxu0 0
          %2194 = vmatpush1.bf16.msra.mxu0 0
          %2195 = vmatprep.subr.bf16.mxu0 0
          %2196 = vmatpush1.bf16.msra.mxu0 0
          %2197 = vmatprep.subr.bf16.mxu0 0
          %2198 = vmatpush1.bf16.msra.mxu0 0
          %2199 = vmatprep.subr.bf16.mxu0 %v2179
          %2200 = vmatpush1.bf16.msra.mxu0 %v2178
          %2201 = vmatprep.subr.bf16.mxu0 %v2177
          %2202 = vmatpush1.bf16.msra.mxu0 %v2176
          %2203 = vmatprep.subr.bf16.mxu0 %v2175
          %2204 = vmatpush1.bf16.msra.mxu0 %v2174
          %2205 = vmatprep.subr.bf16.mxu0 %v2173
          %2206 = vmatpush1.bf16.msra.mxu0 %v2172
          %2207 = vmatprep.subr.bf16.mxu0 0
          %2208 = vmatpush2.bf16.msra.mxu0 0
          %2209 = vmatprep.subr.bf16.mxu0 0
          %2210 = vmatpush2.bf16.msra.mxu0 0
          %2211 = vmatprep.subr.bf16.mxu0 0
          %2212 = vmatpush2.bf16.msra.mxu0 0
          %2213 = vmatprep.subr.bf16.mxu0 0
          %2214 = vmatpush2.bf16.msra.mxu0 0
          %2215 = vmatprep.subr.bf16.mxu0 0
          %2216 = vmatpush2.bf16.msra.mxu0 0
          %2217 = vmatprep.subr.bf16.mxu0 0
          %2218 = vmatpush2.bf16.msra.mxu0 0
          %2219 = vmatprep.subr.bf16.mxu0 0
          %2220 = vmatpush2.bf16.msra.mxu0 0
          %2221 = vmatprep.subr.bf16.mxu0 0
          %2222 = vmatpush2.bf16.msra.mxu0 0
          %2223 = vmatprep.mubr.bf16.mxu0 0
          %2224 = vmatmul.mubr.bf16.gmra.mxu0 %v2189
          %v2225 = vpop.f32.mrf.mxu0
          %v2226 = vadd.f32 %v2141, %v2225
          %v2227 = vpop.f32.mrf.mxu0
          %v2228 = vadd.f32 %v2145, %v2227
          %v2229 = vpop.f32.mrf.mxu0
          %v2230 = vpop.f32.mrf.mxu0
          %2231 = vdwg.mxu0
          %v2234 = vcombine.low %v2226, %v2228
          %v2236 = vunpack.c.l.s4 1983009808
          %v2237 = vunpack.c.0.s8 %v2236
          %v2238 = vlaneseq
          %v2239 = vshrl.u32 %v2238, 7
          %v2240 = vsub.s32 %v2237, %v2239
          %v2241 = vrot.slane %v2234, %v2240
          %2243 = vst [vmem:[#allocation19] sm:$0xf] %v2241
        $region144: #{tpu_custom_call.1} parent=99 // pred_fallthru
          _
        // Predicated region
        $region145: #{tpu_custom_call.1} parent=99 // pred_check
          %p2244 = pneg %p530
        $region146: #{tpu_custom_call.1} parent=99 // pred_check_branch
          %2246 = sbr.rel (%p2244) target = $region148
        $region147: #{tpu_custom_call.1} parent=99 // pred_region
          %s2248 = ssub.s32 64, 64
          %2249 = vsyncadd [#allocation6], %s2248
          %s2251 = sshll.u32 [#allocation19], 4
          %s2252 = int_to_ptr.vmem [resolvable:$true] %s2251
          %2254 = dma.vmem_to_hbm [thread:$0]  %s2252, 64, %s20, [#allocation6]
        $region148: #{tpu_custom_call.1} parent=99 // pred_fallthru
          _
        // Predicated region
        $region149: #{tpu_custom_call.1} parent=99 // pred_check
          %p2255 = pneg %p551
        $region150: #{tpu_custom_call.1} parent=99 // pred_check_branch
          %2257 = sbr.rel (%p2255) target = $region152
        $region151: #{tpu_custom_call.1} parent=99 // pred_region
          _
        $region152: #{tpu_custom_call.1} parent=99 // pred_fallthru
          _
        // Predicated region
        $region153: #{tpu_custom_call.1} parent=99 // pred_check
          %p2258 = pneg %p530
        $region154: #{tpu_custom_call.1} parent=99 // pred_check_branch
          %2260 = sbr.rel (%p2258) target = $region156
        $region155: #{tpu_custom_call.1} parent=99 // pred_region
          %2261 = dma.done [#allocation6], 64
        $region156: #{tpu_custom_call.1} parent=99 // pred_fallthru
          _
        // Predicated region
        $region157: #{tpu_custom_call.1} parent=99 // pred_check
          %p2262 = pneg %p551
        $region158: #{tpu_custom_call.1} parent=99 // pred_check_branch
          %2264 = sbr.rel (%p2262) target = $region160
        $region159: #{tpu_custom_call.1} parent=99 // pred_region
          _
        $region160: #{tpu_custom_call.1} parent=99 // pred_fallthru
          _
      $region100: #{tpu_custom_call.1} parent=5 // pred_fallthru
        _
      %p2265 = scmp.le.s32.totalorder 2, %s42
      // Predicated region
      $region161: #{tpu_custom_call.1} parent=5 // pred_check
        %p2266 = pneg %p2265
      $region162: #{tpu_custom_call.1} parent=5 // pred_check_branch
        %2268 = sbr.rel (%p2266) target = $region164
      $region163: #{tpu_custom_call.1} parent=5 // pred_region
        %s2269 = ssub.s32 %s42, 2
      $region164: #{tpu_custom_call.1} parent=5 // pred_fallthru
        _
    $region6: #{tpu_custom_call.1} parent=1 // loop_footer
      %s46 = sadd.s32 1, %s42
    $region7: #{tpu_custom_call.1} parent=1 // loop_footer_branch
      %41 = sbr.rel target = $region3
    $region8: #{tpu_custom_call.1} parent=1 // loop_exit
      _
    %2270 = vsyncpa [#allocation5], 1
    %s2271 = scalar_lea.sflag [#allocation5], 1
    %2272 = vsyncpa %s2271, 1
    %2273 = vsyncpa [#allocation8], 1
    %2274 = vsyncpa [#allocation11], 1
    %s2275 = scalar_lea.sflag [#allocation11], 1
    %2276 = vsyncpa %s2275, 1
    %2277 = vsyncpa [#allocation14], 1
    %s2278 = scalar_lea.sflag [#allocation14], 1
    %2279 = vsyncpa %s2278, 1
    %2280 = vsyncpa [#allocation17], 1
    %s2281 = scalar_lea.sflag [#allocation17], 1
    %2282 = vsyncpa %s2281, 1
    %2283 = vsyncpa [#allocation6], 1
    %s2284 = scalar_lea.sflag [#allocation6], 1
    %2285 = vsyncpa %s2284, 1

</llo_original>
